<compile_context>
chip_gen: v6e
topology: v6e:2x2x1
jax: 0.10.0
libtpu: 0.0.40
codegen_flags: <defaults>
</compile_context>

<pallas_src>
import numpy as np
import jax
import jax.numpy as jnp
from jax.experimental import pallas as pl
from jax.experimental.pallas import tpu as pltpu

# ----------------------------- model config ---------------------------------
B = 2               # batch per siamese branch
C_IN = 4            # input channels
H = W = 16          # spatial
C_OUT = 8           # conv output channels
K = 3               # conv kernel (stride=1, padding=1 -> same spatial)
HW = H * W          # 256
KKC = K * K * C_IN  # 36
FC_IN = C_OUT * HW  # 2048
FC_OUT = 32
N_IMG = 2 * B       # both siamese branches stacked into one kernel call
LANES = N_IMG * HW  # 1024  lane-dense minor dim used throughout the kernel


# ------------------------------ Pallas kernel --------------------------------
def snn_fused_kernel(pT_ref, wc_ref, bc_ref, wf_ref, bf_ref, o_ref, flat_s):
    """conv(3x3,pad=1)+bias+ReLU+flatten+FC for all images of both branches.

    pT_ref: (KKC, LANES)     im2col patches, row = cin*9 + kh*3 + kw,
                             col = img*HW + h*W + w  (lane-dense: 1024 lanes)
    wc_ref: (C_OUT, KKC)     conv weight, column order (cin, kh, kw)
    bc_ref: (C_OUT, 1)       conv bias (broadcast over the 1024 lanes)
    wf_ref: (FC_IN, FC_OUT)  fc weight, row order = c*HW + p (PyTorch CHW flatten)
    bf_ref: (1, FC_OUT)      fc bias
    o_ref : (N_IMG, FC_OUT)
    flat_s: VMEM (N_IMG, FC_IN) scratch: conv activations in CHW-flatten order
    """
    # Conv for the whole batch / both branches: ONE MXU matmul, then a single
    # bias+ReLU VPU pass over the lane-dense (C_OUT, LANES) activation.
    conv = jnp.dot(wc_ref[...], pT_ref[...], preferred_element_type=jnp.float32)
    conv = jnp.maximum(conv + bc_ref[...], 0.0)              # (C_OUT, LANES)

    # Relayout (C_OUT, N_IMG*HW) -> (N_IMG, C_OUT*HW): 32 static copies whose
    # lane offsets are all multiples of 256 (aligned vreg placement; only a
    # cheap sublane select per copy).  This is what lets the FC be one matmul.
    for img in range(N_IMG):
        for c in range(C_OUT):
            flat_s[img:img + 1, c * HW:(c + 1) * HW] = (
                conv[c:c + 1, img * HW:(img + 1) * HW])

    # FC for all images: ONE MXU matmul + bias, single output store.
    y = jnp.dot(flat_s[...], wf_ref[...], preferred_element_type=jnp.float32)
    o_ref[...] = (y + bf_ref[...]).astype(o_ref.dtype)


def _snn_pallas(pT, wc2d, bc, wf_flat, bf):
    return pl.pallas_call(
        snn_fused_kernel,
        out_shape=jax.ShapeDtypeStruct((N_IMG, FC_OUT), jnp.float32),
        in_specs=[pl.BlockSpec(memory_space=pltpu.MemorySpace.VMEM)] * 5,
        out_specs=pl.BlockSpec(memory_space=pltpu.MemorySpace.VMEM),
        scratch_shapes=[pltpu.VMEM((N_IMG, FC_IN), jnp.float32)],
    )(pT, wc2d, bc, wf_flat, bf)


# ------------------------------ host-side glue --------------------------------
def _patches_lanedense(x_nchw):
    """NCHW -> im2col patches (KKC, N*HW), zero padding=1, lane-dense columns.

    Row order (cin, kh, kw) matches w_conv.reshape(C_OUT, C_IN*K*K); column
    order is img*HW + h*W + w.  A handful of tiny XLA ops on 16 KB of input
    that fuse into one small prologue.
    """
    n = x_nchw.shape[0]
    xp = jnp.pad(x_nchw, ((0, 0), (0, 0), (1, 1), (1, 1)))
    shifts = [xp[:, :, kh:kh + H, kw:kw + W] for kh in range(K) for kw in range(K)]
    p = jnp.stack(shifts, axis=2)                     # (N, C_IN, K*K, H, W)
    p = p.reshape(n, KKC, HW)                         # rows already (cin, kh, kw)
    return jnp.transpose(p, (1, 0, 2)).reshape(KKC, n * HW)


@jax.jit
def snn_forward(x1, x2, params):
    """Siamese forward: shared weights, both branches in ONE fused kernel call."""
    wc2d, bc, wf_flat, bf = params
    x = jnp.concatenate([x1, x2], axis=0)             # (N_IMG, C_IN, H, W)
    pT = _patches_lanedense(x)                        # (36, 1024) XLA prologue
    out = _snn_pallas(pT, wc2d, bc, wf_flat, bf)      # Pallas: conv+relu+fc
    return out[:B], out[B:]


# --------------------------- parameter construction --------------------------
def make_params(key):
    k1, k2, k3, k4 = jax.random.split(key, 4)
    # Conv2d: xavier_normal_ weight (PyTorch OIHW), normal_ bias
    fan_in_c, fan_out_c = C_IN * K * K, C_OUT * K * K
    std_c = float(np.sqrt(2.0 / (fan_in_c + fan_out_c)))
    w_conv_pt = jax.random.normal(k1, (C_OUT, C_IN, K, K), jnp.float32) * std_c
    b_conv = jax.random.normal(k2, (C_OUT,), jnp.float32)
    # Linear: xavier_normal_ weight (out, in), normal_ bias
    std_f = float(np.sqrt(2.0 / (FC_IN + FC_OUT)))
    w_fc_pt = jax.random.normal(k3, (FC_OUT, FC_IN), jnp.float32) * std_f
    b_fc = jax.random.normal(k4, (FC_OUT,), jnp.float32)

    # Kernel layouts:
    wc2d = w_conv_pt.reshape(C_OUT, KKC)              # (8, 36)   cols (cin,kh,kw)
    bc = b_conv.reshape(C_OUT, 1)                     # (8, 1)
    wf_flat = w_fc_pt.T                               # (2048, 32) rows = c*HW + p
    bf = b_fc.reshape(1, FC_OUT)                      # (1, 32)

    kernel_params = (wc2d, bc, wf_flat, bf)
    pt_params = (w_conv_pt, b_conv, w_fc_pt, b_fc)
    return kernel_params, pt_params


# ------------------------------ pure-JAX reference ---------------------------
def reference_forward_once(x, pt_params):
    w_conv, b_conv, w_fc, b_fc = pt_params
    y = jax.lax.conv_general_dilated(
        x, w_conv, window_strides=(1, 1), padding="SAME",
        dimension_numbers=("NCHW", "OIHW", "NCHW"))
    y = jax.nn.relu(y + b_conv[None, :, None, None])
    flat = y.reshape(y.shape[0], -1)                  # CHW flatten (PyTorch)
    return flat @ w_fc.T + b_fc


# ---------------------------------- main --------------------------------------
if __name__ == "__main__":
    key = jax.random.PRNGKey(0)
    kp, kx1, kx2 = jax.random.split(key, 3)
    kernel_params, pt_params = make_params(kp)

    x1 = jax.random.normal(kx1, (B, C_IN, H, W), jnp.float32)
    x2 = jax.random.normal(kx2, (B, C_IN, H, W), jnp.float32)

    out1, out2 = snn_forward(x1, x2, kernel_params)
    jax.block_until_ready((out1, out2))

    ref1 = reference_forward_once(x1, pt_params)
    ref2 = reference_forward_once(x2, pt_params)

    assert out1.shape == (B, FC_OUT) and out2.shape == (B, FC_OUT)
    assert np.allclose(np.asarray(out1), np.asarray(ref1), rtol=1e-3, atol=1e-3)
    assert np.allclose(np.asarray(out2), np.asarray(ref2), rtol=1e-3, atol=1e-3)

    print("KERNEL_OK")
</pallas_src>

<mosaic_0001>
module attributes {stable_mosaic.version = 11 : i64} {
  func.func @snn_fused_kernel(%arg0: memref<36x1024xf32, #tpu.memory_space<vmem>>, %arg1: memref<8x36xf32, #tpu.memory_space<vmem>>, %arg2: memref<8x1xf32, #tpu.memory_space<vmem>>, %arg3: memref<2048x32xf32, #tpu.memory_space<vmem>>, %arg4: memref<1x32xf32, #tpu.memory_space<vmem>>, %arg5: memref<4x32xf32, #tpu.memory_space<vmem>>, %arg6: memref<4x2048xf32, #tpu.memory_space<vmem>>) attributes {dimension_semantics = [], scalar_prefetch = 0 : i64, scratch_operands = 1 : i64, tpu.core_type = #tpu.core_type<tc>} {
    %c0 = arith.constant 0 : index
    %c0_0 = arith.constant 0 : index
    %0 = vector.load %arg1[%c0, %c0_0] : memref<8x36xf32, #tpu.memory_space<vmem>>, vector<8x36xf32>
    %c0_1 = arith.constant 0 : index
    %c0_2 = arith.constant 0 : index
    %1 = vector.load %arg0[%c0_1, %c0_2] : memref<36x1024xf32, #tpu.memory_space<vmem>>, vector<36x1024xf32>
    %cst = arith.constant dense<0.000000e+00> : vector<8x1024xf32>
    %2 = tpu.matmul %0, %1, %cst {dimension_numbers = #tpu.dot_dimension_numbers<[1], [0], [0], [1], [0, 0, 1, 1], [], []>} : vector<8x36xf32>, vector<36x1024xf32>, vector<8x1024xf32> -> vector<8x1024xf32>
    %c0_3 = arith.constant 0 : index
    %c0_4 = arith.constant 0 : index
    %3 = vector.load %arg2[%c0_3, %c0_4] : memref<8x1xf32, #tpu.memory_space<vmem>>, vector<8x1xf32>
    %4 = vector.broadcast %3 : vector<8x1xf32> to vector<8x1024xf32>
    %5 = arith.addf %2, %4 : vector<8x1024xf32>
    %cst_5 = arith.constant 0.000000e+00 : f32
    %6 = vector.broadcast %cst_5 : f32 to vector<8x1024xf32>
    %7 = arith.maximumf %5, %6 : vector<8x1024xf32>
    %8 = vector.extract_strided_slice %7 {offsets = [0, 0], sizes = [1, 256], strides = [1, 1]} : vector<8x1024xf32> to vector<1x256xf32>
    %c0_6 = arith.constant 0 : index
    %c0_7 = arith.constant 0 : index
    %9 = vector.load %arg6[%c0_6, %c0_7] : memref<4x2048xf32, #tpu.memory_space<vmem>>, vector<1x256xf32>
    tpu.vector_store %arg6[%c0_6, %c0_7], %8 {strides = array<i32>} : memref<4x2048xf32, #tpu.memory_space<vmem>>, vector<1x256xf32>,
    %10 = vector.extract_strided_slice %7 {offsets = [1, 0], sizes = [1, 256], strides = [1, 1]} : vector<8x1024xf32> to vector<1x256xf32>
    %c0_8 = arith.constant 0 : index
    %c256 = arith.constant 256 : index
    %11 = vector.load %arg6[%c0_8, %c256] : memref<4x2048xf32, #tpu.memory_space<vmem>>, vector<1x256xf32>
    tpu.vector_store %arg6[%c0_8, %c256], %10 {strides = array<i32>} : memref<4x2048xf32, #tpu.memory_space<vmem>>, vector<1x256xf32>,
    %12 = vector.extract_strided_slice %7 {offsets = [2, 0], sizes = [1, 256], strides = [1, 1]} : vector<8x1024xf32> to vector<1x256xf32>
    %c0_9 = arith.constant 0 : index
    %c512 = arith.constant 512 : index
    %13 = vector.load %arg6[%c0_9, %c512] : memref<4x2048xf32, #tpu.memory_space<vmem>>, vector<1x256xf32>
    tpu.vector_store %arg6[%c0_9, %c512], %12 {strides = array<i32>} : memref<4x2048xf32, #tpu.memory_space<vmem>>, vector<1x256xf32>,
    %14 = vector.extract_strided_slice %7 {offsets = [3, 0], sizes = [1, 256], strides = [1, 1]} : vector<8x1024xf32> to vector<1x256xf32>
    %c0_10 = arith.constant 0 : index
    %c768 = arith.constant 768 : index
    %15 = vector.load %arg6[%c0_10, %c768] : memref<4x2048xf32, #tpu.memory_space<vmem>>, vector<1x256xf32>
    tpu.vector_store %arg6[%c0_10, %c768], %14 {strides = array<i32>} : memref<4x2048xf32, #tpu.memory_space<vmem>>, vector<1x256xf32>,
    %16 = vector.extract_strided_slice %7 {offsets = [4, 0], sizes = [1, 256], strides = [1, 1]} : vector<8x1024xf32> to vector<1x256xf32>
    %c0_11 = arith.constant 0 : index
    %c1024 = arith.constant 1024 : index
    %17 = vector.load %arg6[%c0_11, %c1024] : memref<4x2048xf32, #tpu.memory_space<vmem>>, vector<1x256xf32>
    tpu.vector_store %arg6[%c0_11, %c1024], %16 {strides = array<i32>} : memref<4x2048xf32, #tpu.memory_space<vmem>>, vector<1x256xf32>,
    %18 = vector.extract_strided_slice %7 {offsets = [5, 0], sizes = [1, 256], strides = [1, 1]} : vector<8x1024xf32> to vector<1x256xf32>
    %c0_12 = arith.constant 0 : index
    %c1280 = arith.constant 1280 : index
    %19 = vector.load %arg6[%c0_12, %c1280] : memref<4x2048xf32, #tpu.memory_space<vmem>>, vector<1x256xf32>
    tpu.vector_store %arg6[%c0_12, %c1280], %18 {strides = array<i32>} : memref<4x2048xf32, #tpu.memory_space<vmem>>, vector<1x256xf32>,
    %20 = vector.extract_strided_slice %7 {offsets = [6, 0], sizes = [1, 256], strides = [1, 1]} : vector<8x1024xf32> to vector<1x256xf32>
    %c0_13 = arith.constant 0 : index
    %c1536 = arith.constant 1536 : index
    %21 = vector.load %arg6[%c0_13, %c1536] : memref<4x2048xf32, #tpu.memory_space<vmem>>, vector<1x256xf32>
    tpu.vector_store %arg6[%c0_13, %c1536], %20 {strides = array<i32>} : memref<4x2048xf32, #tpu.memory_space<vmem>>, vector<1x256xf32>,
    %22 = vector.extract_strided_slice %7 {offsets = [7, 0], sizes = [1, 256], strides = [1, 1]} : vector<8x1024xf32> to vector<1x256xf32>
    %c0_14 = arith.constant 0 : index
    %c1792 = arith.constant 1792 : index
    %23 = vector.load %arg6[%c0_14, %c1792] : memref<4x2048xf32, #tpu.memory_space<vmem>>, vector<1x256xf32>
    tpu.vector_store %arg6[%c0_14, %c1792], %22 {strides = array<i32>} : memref<4x2048xf32, #tpu.memory_space<vmem>>, vector<1x256xf32>,
    %24 = vector.extract_strided_slice %7 {offsets = [0, 256], sizes = [1, 256], strides = [1, 1]} : vector<8x1024xf32> to vector<1x256xf32>
    %c1 = arith.constant 1 : index
    %c0_15 = arith.constant 0 : index
    %25 = vector.load %arg6[%c1, %c0_15] : memref<4x2048xf32, #tpu.memory_space<vmem>>, vector<1x256xf32>
    tpu.vector_store %arg6[%c1, %c0_15], %24 {strides = array<i32>} : memref<4x2048xf32, #tpu.memory_space<vmem>>, vector<1x256xf32>,
    %26 = vector.extract_strided_slice %7 {offsets = [1, 256], sizes = [1, 256], strides = [1, 1]} : vector<8x1024xf32> to vector<1x256xf32>
    %c1_16 = arith.constant 1 : index
    %c256_17 = arith.constant 256 : index
    %27 = vector.load %arg6[%c1_16, %c256_17] : memref<4x2048xf32, #tpu.memory_space<vmem>>, vector<1x256xf32>
    tpu.vector_store %arg6[%c1_16, %c256_17], %26 {strides = array<i32>} : memref<4x2048xf32, #tpu.memory_space<vmem>>, vector<1x256xf32>,
    %28 = vector.extract_strided_slice %7 {offsets = [2, 256], sizes = [1, 256], strides = [1, 1]} : vector<8x1024xf32> to vector<1x256xf32>
    %c1_18 = arith.constant 1 : index
    %c512_19 = arith.constant 512 : index
    %29 = vector.load %arg6[%c1_18, %c512_19] : memref<4x2048xf32, #tpu.memory_space<vmem>>, vector<1x256xf32>
    tpu.vector_store %arg6[%c1_18, %c512_19], %28 {strides = array<i32>} : memref<4x2048xf32, #tpu.memory_space<vmem>>, vector<1x256xf32>,
    %30 = vector.extract_strided_slice %7 {offsets = [3, 256], sizes = [1, 256], strides = [1, 1]} : vector<8x1024xf32> to vector<1x256xf32>
    %c1_20 = arith.constant 1 : index
    %c768_21 = arith.constant 768 : index
    %31 = vector.load %arg6[%c1_20, %c768_21] : memref<4x2048xf32, #tpu.memory_space<vmem>>, vector<1x256xf32>
    tpu.vector_store %arg6[%c1_20, %c768_21], %30 {strides = array<i32>} : memref<4x2048xf32, #tpu.memory_space<vmem>>, vector<1x256xf32>,
    %32 = vector.extract_strided_slice %7 {offsets = [4, 256], sizes = [1, 256], strides = [1, 1]} : vector<8x1024xf32> to vector<1x256xf32>
    %c1_22 = arith.constant 1 : index
    %c1024_23 = arith.constant 1024 : index
    %33 = vector.load %arg6[%c1_22, %c1024_23] : memref<4x2048xf32, #tpu.memory_space<vmem>>, vector<1x256xf32>
    tpu.vector_store %arg6[%c1_22, %c1024_23], %32 {strides = array<i32>} : memref<4x2048xf32, #tpu.memory_space<vmem>>, vector<1x256xf32>,
    %34 = vector.extract_strided_slice %7 {offsets = [5, 256], sizes = [1, 256], strides = [1, 1]} : vector<8x1024xf32> to vector<1x256xf32>
    %c1_24 = arith.constant 1 : index
    %c1280_25 = arith.constant 1280 : index
    %35 = vector.load %arg6[%c1_24, %c1280_25] : memref<4x2048xf32, #tpu.memory_space<vmem>>, vector<1x256xf32>
    tpu.vector_store %arg6[%c1_24, %c1280_25], %34 {strides = array<i32>} : memref<4x2048xf32, #tpu.memory_space<vmem>>, vector<1x256xf32>,
    %36 = vector.extract_strided_slice %7 {offsets = [6, 256], sizes = [1, 256], strides = [1, 1]} : vector<8x1024xf32> to vector<1x256xf32>
    %c1_26 = arith.constant 1 : index
    %c1536_27 = arith.constant 1536 : index
    %37 = vector.load %arg6[%c1_26, %c1536_27] : memref<4x2048xf32, #tpu.memory_space<vmem>>, vector<1x256xf32>
    tpu.vector_store %arg6[%c1_26, %c1536_27], %36 {strides = array<i32>} : memref<4x2048xf32, #tpu.memory_space<vmem>>, vector<1x256xf32>,
    %38 = vector.extract_strided_slice %7 {offsets = [7, 256], sizes = [1, 256], strides = [1, 1]} : vector<8x1024xf32> to vector<1x256xf32>
    %c1_28 = arith.constant 1 : index
    %c1792_29 = arith.constant 1792 : index
    %39 = vector.load %arg6[%c1_28, %c1792_29] : memref<4x2048xf32, #tpu.memory_space<vmem>>, vector<1x256xf32>
    tpu.vector_store %arg6[%c1_28, %c1792_29], %38 {strides = array<i32>} : memref<4x2048xf32, #tpu.memory_space<vmem>>, vector<1x256xf32>,
    %40 = vector.extract_strided_slice %7 {offsets = [0, 512], sizes = [1, 256], strides = [1, 1]} : vector<8x1024xf32> to vector<1x256xf32>
    %c2 = arith.constant 2 : index
    %c0_30 = arith.constant 0 : index
    %41 = vector.load %arg6[%c2, %c0_30] : memref<4x2048xf32, #tpu.memory_space<vmem>>, vector<1x256xf32>
    tpu.vector_store %arg6[%c2, %c0_30], %40 {strides = array<i32>} : memref<4x2048xf32, #tpu.memory_space<vmem>>, vector<1x256xf32>,
    %42 = vector.extract_strided_slice %7 {offsets = [1, 512], sizes = [1, 256], strides = [1, 1]} : vector<8x1024xf32> to vector<1x256xf32>
    %c2_31 = arith.constant 2 : index
    %c256_32 = arith.constant 256 : index
    %43 = vector.load %arg6[%c2_31, %c256_32] : memref<4x2048xf32, #tpu.memory_space<vmem>>, vector<1x256xf32>
    tpu.vector_store %arg6[%c2_31, %c256_32], %42 {strides = array<i32>} : memref<4x2048xf32, #tpu.memory_space<vmem>>, vector<1x256xf32>,
    %44 = vector.extract_strided_slice %7 {offsets = [2, 512], sizes = [1, 256], strides = [1, 1]} : vector<8x1024xf32> to vector<1x256xf32>
    %c2_33 = arith.constant 2 : index
    %c512_34 = arith.constant 512 : index
    %45 = vector.load %arg6[%c2_33, %c512_34] : memref<4x2048xf32, #tpu.memory_space<vmem>>, vector<1x256xf32>
    tpu.vector_store %arg6[%c2_33, %c512_34], %44 {strides = array<i32>} : memref<4x2048xf32, #tpu.memory_space<vmem>>, vector<1x256xf32>,
    %46 = vector.extract_strided_slice %7 {offsets = [3, 512], sizes = [1, 256], strides = [1, 1]} : vector<8x1024xf32> to vector<1x256xf32>
    %c2_35 = arith.constant 2 : index
    %c768_36 = arith.constant 768 : index
    %47 = vector.load %arg6[%c2_35, %c768_36] : memref<4x2048xf32, #tpu.memory_space<vmem>>, vector<1x256xf32>
    tpu.vector_store %arg6[%c2_35, %c768_36], %46 {strides = array<i32>} : memref<4x2048xf32, #tpu.memory_space<vmem>>, vector<1x256xf32>,
    %48 = vector.extract_strided_slice %7 {offsets = [4, 512], sizes = [1, 256], strides = [1, 1]} : vector<8x1024xf32> to vector<1x256xf32>
    %c2_37 = arith.constant 2 : index
    %c1024_38 = arith.constant 1024 : index
    %49 = vector.load %arg6[%c2_37, %c1024_38] : memref<4x2048xf32, #tpu.memory_space<vmem>>, vector<1x256xf32>
    tpu.vector_store %arg6[%c2_37, %c1024_38], %48 {strides = array<i32>} : memref<4x2048xf32, #tpu.memory_space<vmem>>, vector<1x256xf32>,
    %50 = vector.extract_strided_slice %7 {offsets = [5, 512], sizes = [1, 256], strides = [1, 1]} : vector<8x1024xf32> to vector<1x256xf32>
    %c2_39 = arith.constant 2 : index
    %c1280_40 = arith.constant 1280 : index
    %51 = vector.load %arg6[%c2_39, %c1280_40] : memref<4x2048xf32, #tpu.memory_space<vmem>>, vector<1x256xf32>
    tpu.vector_store %arg6[%c2_39, %c1280_40], %50 {strides = array<i32>} : memref<4x2048xf32, #tpu.memory_space<vmem>>, vector<1x256xf32>,
    %52 = vector.extract_strided_slice %7 {offsets = [6, 512], sizes = [1, 256], strides = [1, 1]} : vector<8x1024xf32> to vector<1x256xf32>
    %c2_41 = arith.constant 2 : index
    %c1536_42 = arith.constant 1536 : index
    %53 = vector.load %arg6[%c2_41, %c1536_42] : memref<4x2048xf32, #tpu.memory_space<vmem>>, vector<1x256xf32>
    tpu.vector_store %arg6[%c2_41, %c1536_42], %52 {strides = array<i32>} : memref<4x2048xf32, #tpu.memory_space<vmem>>, vector<1x256xf32>,
    %54 = vector.extract_strided_slice %7 {offsets = [7, 512], sizes = [1, 256], strides = [1, 1]} : vector<8x1024xf32> to vector<1x256xf32>
    %c2_43 = arith.constant 2 : index
    %c1792_44 = arith.constant 1792 : index
    %55 = vector.load %arg6[%c2_43, %c1792_44] : memref<4x2048xf32, #tpu.memory_space<vmem>>, vector<1x256xf32>
    tpu.vector_store %arg6[%c2_43, %c1792_44], %54 {strides = array<i32>} : memref<4x2048xf32, #tpu.memory_space<vmem>>, vector<1x256xf32>,
    %56 = vector.extract_strided_slice %7 {offsets = [0, 768], sizes = [1, 256], strides = [1, 1]} : vector<8x1024xf32> to vector<1x256xf32>
    %c3 = arith.constant 3 : index
    %c0_45 = arith.constant 0 : index
    %57 = vector.load %arg6[%c3, %c0_45] : memref<4x2048xf32, #tpu.memory_space<vmem>>, vector<1x256xf32>
    tpu.vector_store %arg6[%c3, %c0_45], %56 {strides = array<i32>} : memref<4x2048xf32, #tpu.memory_space<vmem>>, vector<1x256xf32>,
    %58 = vector.extract_strided_slice %7 {offsets = [1, 768], sizes = [1, 256], strides = [1, 1]} : vector<8x1024xf32> to vector<1x256xf32>
    %c3_46 = arith.constant 3 : index
    %c256_47 = arith.constant 256 : index
    %59 = vector.load %arg6[%c3_46, %c256_47] : memref<4x2048xf32, #tpu.memory_space<vmem>>, vector<1x256xf32>
    tpu.vector_store %arg6[%c3_46, %c256_47], %58 {strides = array<i32>} : memref<4x2048xf32, #tpu.memory_space<vmem>>, vector<1x256xf32>,
    %60 = vector.extract_strided_slice %7 {offsets = [2, 768], sizes = [1, 256], strides = [1, 1]} : vector<8x1024xf32> to vector<1x256xf32>
    %c3_48 = arith.constant 3 : index
    %c512_49 = arith.constant 512 : index
    %61 = vector.load %arg6[%c3_48, %c512_49] : memref<4x2048xf32, #tpu.memory_space<vmem>>, vector<1x256xf32>
    tpu.vector_store %arg6[%c3_48, %c512_49], %60 {strides = array<i32>} : memref<4x2048xf32, #tpu.memory_space<vmem>>, vector<1x256xf32>,
    %62 = vector.extract_strided_slice %7 {offsets = [3, 768], sizes = [1, 256], strides = [1, 1]} : vector<8x1024xf32> to vector<1x256xf32>
    %c3_50 = arith.constant 3 : index
    %c768_51 = arith.constant 768 : index
    %63 = vector.load %arg6[%c3_50, %c768_51] : memref<4x2048xf32, #tpu.memory_space<vmem>>, vector<1x256xf32>
    tpu.vector_store %arg6[%c3_50, %c768_51], %62 {strides = array<i32>} : memref<4x2048xf32, #tpu.memory_space<vmem>>, vector<1x256xf32>,
    %64 = vector.extract_strided_slice %7 {offsets = [4, 768], sizes = [1, 256], strides = [1, 1]} : vector<8x1024xf32> to vector<1x256xf32>
    %c3_52 = arith.constant 3 : index
    %c1024_53 = arith.constant 1024 : index
    %65 = vector.load %arg6[%c3_52, %c1024_53] : memref<4x2048xf32, #tpu.memory_space<vmem>>, vector<1x256xf32>
    tpu.vector_store %arg6[%c3_52, %c1024_53], %64 {strides = array<i32>} : memref<4x2048xf32, #tpu.memory_space<vmem>>, vector<1x256xf32>,
    %66 = vector.extract_strided_slice %7 {offsets = [5, 768], sizes = [1, 256], strides = [1, 1]} : vector<8x1024xf32> to vector<1x256xf32>
    %c3_54 = arith.constant 3 : index
    %c1280_55 = arith.constant 1280 : index
    %67 = vector.load %arg6[%c3_54, %c1280_55] : memref<4x2048xf32, #tpu.memory_space<vmem>>, vector<1x256xf32>
    tpu.vector_store %arg6[%c3_54, %c1280_55], %66 {strides = array<i32>} : memref<4x2048xf32, #tpu.memory_space<vmem>>, vector<1x256xf32>,
    %68 = vector.extract_strided_slice %7 {offsets = [6, 768], sizes = [1, 256], strides = [1, 1]} : vector<8x1024xf32> to vector<1x256xf32>
    %c3_56 = arith.constant 3 : index
    %c1536_57 = arith.constant 1536 : index
    %69 = vector.load %arg6[%c3_56, %c1536_57] : memref<4x2048xf32, #tpu.memory_space<vmem>>, vector<1x256xf32>
    tpu.vector_store %arg6[%c3_56, %c1536_57], %68 {strides = array<i32>} : memref<4x2048xf32, #tpu.memory_space<vmem>>, vector<1x256xf32>,
    %70 = vector.extract_strided_slice %7 {offsets = [7, 768], sizes = [1, 256], strides = [1, 1]} : vector<8x1024xf32> to vector<1x256xf32>
    %c3_58 = arith.constant 3 : index
    %c1792_59 = arith.constant 1792 : index
    %71 = vector.load %arg6[%c3_58, %c1792_59] : memref<4x2048xf32, #tpu.memory_space<vmem>>, vector<1x256xf32>
    tpu.vector_store %arg6[%c3_58, %c1792_59], %70 {strides = array<i32>} : memref<4x2048xf32, #tpu.memory_space<vmem>>, vector<1x256xf32>,
    %c0_60 = arith.constant 0 : index
    %c0_61 = arith.constant 0 : index
    %72 = vector.load %arg6[%c0_60, %c0_61] : memref<4x2048xf32, #tpu.memory_space<vmem>>, vector<4x2048xf32>
    %c0_62 = arith.constant 0 : index
    %c0_63 = arith.constant 0 : index
    %73 = vector.load %arg3[%c0_62, %c0_63] : memref<2048x32xf32, #tpu.memory_space<vmem>>, vector<2048x32xf32>
    %cst_64 = arith.constant dense<0.000000e+00> : vector<4x32xf32>
    %74 = tpu.matmul %72, %73, %cst_64 {dimension_numbers = #tpu.dot_dimension_numbers<[1], [0], [0], [1], [0, 0, 1, 1], [], []>} : vector<4x2048xf32>, vector<2048x32xf32>, vector<4x32xf32> -> vector<4x32xf32>
    %c0_65 = arith.constant 0 : index
    %c0_66 = arith.constant 0 : index
    %75 = vector.load %arg4[%c0_65, %c0_66] : memref<1x32xf32, #tpu.memory_space<vmem>>, vector<1x32xf32>
    %76 = vector.broadcast %75 : vector<1x32xf32> to vector<4x32xf32>
    %77 = arith.addf %74, %76 : vector<4x32xf32>
    %c0_67 = arith.constant 0 : index
    %c0_68 = arith.constant 0 : index
    %78 = vector.load %arg5[%c0_67, %c0_68] : memref<4x32xf32, #tpu.memory_space<vmem>>, vector<4x32xf32>
    tpu.vector_store %arg5[%c0_67, %c0_68], %77 {strides = array<i32>} : memref<4x32xf32, #tpu.memory_space<vmem>>, vector<4x32xf32>,
    return
  }
}

</mosaic_0001>

<llo_original>
// kernel: snn_forward.1
$region0: #{snn_forward.1}
  #allocation0 [shape = 'u32[]', space=smem, size = 0x4, offset = 0x4, fixed_abs, tag = 'smem constant byte address 0x4 - core index']
  #allocation1 [shape = 'u32[144,128]{1,0:T(1,128)}', space=vmem, size = 0x12000, scoped, tag = 'internal scratch']
  #allocation2 [shape = 'f32[4,2048]{1,0:T(4,128)}', space=vmem, size = 0x8000, scoped, tag = 'scratch operand']
  %s0 = inlined_call_operand.vmem [shape: f32[36,1024], index: 0, kind: input, shape index: {}]
  %s1 = inlined_call_operand.vmem [shape: f32[8,36], index: 1, kind: input, shape index: {}]
  %s2 = inlined_call_operand.vmem [shape: f32[8,1], index: 2, kind: input, shape index: {}]
  %s3 = inlined_call_operand.vmem [shape: f32[2048,32], index: 3, kind: input, shape index: {}]
  %s4 = inlined_call_operand.vmem [shape: f32[1,32], index: 4, kind: input, shape index: {}]
  %s5 = inlined_call_operand.vmem [shape: f32[4,32], index: 5, kind: output, shape index: {}]
  %s6 = sld [smem:[#allocation0]]
  $region30: #{snn_forward.1} parent=0
    _
  %s8 = ssub.s32 1, %s6
  %s9 = scalar_select 0, %s8, %s6
  // Predicated region
  $region2: #{snn_forward.1} parent=0 // pred_check
    _
  $region3: #{snn_forward.1} parent=0 // pred_check_branch
    %11 = sbr.rel (0) target = $region5
  $region4: #{snn_forward.1} parent=0 // pred_region
    _
  $region5: #{snn_forward.1} parent=0 // pred_fallthru
    _
  // Predicated region
  $region6: #{snn_forward.1} parent=0 // pred_check
    _
  $region7: #{snn_forward.1} parent=0 // pred_check_branch
    %13 = sbr.rel (0) target = $region9
  $region8: #{snn_forward.1} parent=0 // pred_region
    _
  $region9: #{snn_forward.1} parent=0 // pred_fallthru
    _
  // Predicated region
  $region10: #{snn_forward.1} parent=0 // pred_check
    _
  $region11: #{snn_forward.1} parent=0 // pred_check_branch
    %15 = sbr.rel (0) target = $region13
  $region12: #{snn_forward.1} parent=0 // pred_region
    _
  $region13: #{snn_forward.1} parent=0 // pred_fallthru
    _
  // Predicated region
  $region14: #{snn_forward.1} parent=0 // pred_check
    _
  $region15: #{snn_forward.1} parent=0 // pred_check_branch
    %17 = sbr.rel (0) target = $region17
  $region16: #{snn_forward.1} parent=0 // pred_region
    _
  $region17: #{snn_forward.1} parent=0 // pred_fallthru
    _
  // Predicated region
  $region18: #{snn_forward.1} parent=0 // pred_check
    _
  $region19: #{snn_forward.1} parent=0 // pred_check_branch
    %19 = sbr.rel (0) target = $region21
  $region20: #{snn_forward.1} parent=0 // pred_region
    _
  $region21: #{snn_forward.1} parent=0 // pred_fallthru
    _
  %v20 = vld [vmem:[%s1] sm:$0xff]
  %v21 = vld [vmem:[%s0] sm:$0xff]
  %v22 = vld [vmem:[%s0 + $0x8] sm:$0xff]
  %v23 = vld [vmem:[%s0 + $0x10] sm:$0xff]
  %v24 = vld [vmem:[%s0 + $0x18] sm:$0xff]
  %v25 = vld [vmem:[%s0 + $0x20] sm:$0xff]
  %v26 = vld [vmem:[%s0 + $0x28] sm:$0xff]
  %v27 = vld [vmem:[%s0 + $0x30] sm:$0xff]
  %v28 = vld [vmem:[%s0 + $0x38] sm:$0xff]
  %v29 = vld [vmem:[%s0 + $0x40] sm:$0xff]
  %v30 = vld [vmem:[%s0 + $0x48] sm:$0xff]
  %v31 = vld [vmem:[%s0 + $0x50] sm:$0xff]
  %v32 = vld [vmem:[%s0 + $0x58] sm:$0xff]
  %v33 = vld [vmem:[%s0 + $0x60] sm:$0xff]
  %v34 = vld [vmem:[%s0 + $0x68] sm:$0xff]
  %v35 = vld [vmem:[%s0 + $0x70] sm:$0xff]
  %v36 = vld [vmem:[%s0 + $0x78] sm:$0xff]
  %v37 = vld [vmem:[%s0 + $0x80] sm:$0xff]
  %v38 = vld [vmem:[%s0 + $0x88] sm:$0xff]
  %v39 = vld [vmem:[%s0 + $0x90] sm:$0xff]
  %v40 = vld [vmem:[%s0 + $0x98] sm:$0xff]
  %v41 = vld [vmem:[%s0 + $0xa0] sm:$0xff]
  %v42 = vld [vmem:[%s0 + $0xa8] sm:$0xff]
  %v43 = vld [vmem:[%s0 + $0xb0] sm:$0xff]
  %v44 = vld [vmem:[%s0 + $0xb8] sm:$0xff]
  %v45 = vld [vmem:[%s0 + $0xc0] sm:$0xff]
  %v46 = vld [vmem:[%s0 + $0xc8] sm:$0xff]
  %v47 = vld [vmem:[%s0 + $0xd0] sm:$0xff]
  %v48 = vld [vmem:[%s0 + $0xd8] sm:$0xff]
  %v49 = vld [vmem:[%s0 + $0xe0] sm:$0xff]
  %v50 = vld [vmem:[%s0 + $0xe8] sm:$0xff]
  %v51 = vld [vmem:[%s0 + $0xf0] sm:$0xff]
  %v52 = vld [vmem:[%s0 + $0xf8] sm:$0xff]
  %v53 = vld [vmem:[%s0 + $0x100] sm:$0xf]
  %v54 = vld [vmem:[%s0 + $0x108] sm:$0xf]
  %v55 = vld [vmem:[%s0 + $0x110] sm:$0xf]
  %v56 = vld [vmem:[%s0 + $0x118] sm:$0xf]
  %v57 = vld [vmem:[%s0 + $0x120] sm:$0xf]
  %v58 = vld [vmem:[%s0 + $0x128] sm:$0xf]
  %v59 = vld [vmem:[%s0 + $0x130] sm:$0xf]
  %v60 = vld [vmem:[%s0 + $0x138] sm:$0xf]
  %v61 = vld [vmem:[%s2] sm:$0xff]
  %63 = vset.pattern.permute.xlu0 0
  %64 = vperm.xlu0 %63, %v61
  %v65 = vpop.permute.xlu0 %64
  %vm67 = vcmask 293888
  %v69 = vsel %vm67, %v20, 0
  %vm71 = vcmask 1043456
  %v73 = vsel %vm71, %v53, 0
  %v76 = vsel %vm71, %v54, 0
  %v79 = vsel %vm71, %v55, 0
  %v82 = vsel %vm71, %v56, 0
  %v85 = vsel %vm71, %v57, 0
  %v88 = vsel %vm71, %v58, 0
  %v91 = vsel %vm71, %v59, 0
  %v94 = vsel %vm71, %v60, 0
  %96 = vmatprep.subr.mxu0 0.0
  %97 = vmatpush1.msra.mxu0 0.0
  %98 = vmatprep.subr.mxu0 0.0
  %99 = vmatpush1.msra.mxu0 0.0
  %100 = vmatprep.subr.mxu0 0.0
  %101 = vmatpush1.msra.mxu0 0.0
  %102 = vmatprep.subr.mxu0 0.0
  %103 = vmatpush1.msra.mxu0 0.0
  %104 = vmatprep.subr.mxu0 0.0
  %105 = vmatpush1.msra.mxu0 0.0
  %106 = vmatprep.subr.mxu0 0.0
  %107 = vmatpush1.msra.mxu0 0.0
  %108 = vmatprep.subr.mxu0 0.0
  %109 = vmatpush1.msra.mxu0 0.0
  %110 = vmatprep.subr.mxu0 0.0
  %111 = vmatpush1.msra.mxu0 0.0
  %112 = vmatprep.subr.mxu0 0.0
  %113 = vmatpush1.msra.mxu0 0.0
  %114 = vmatprep.subr.mxu0 0.0
  %115 = vmatpush1.msra.mxu0 0.0
  %116 = vmatprep.subr.mxu0 0.0
  %117 = vmatpush1.msra.mxu0 0.0
  %118 = vmatprep.subr.mxu0 %v76
  %119 = vmatpush1.msra.mxu0 %v73
  %120 = vmatprep.subr.mxu0 %v46
  %121 = vmatpush1.msra.mxu0 %v45
  %122 = vmatprep.subr.mxu0 %v38
  %123 = vmatpush1.msra.mxu0 %v37
  %124 = vmatprep.subr.mxu0 %v30
  %125 = vmatpush1.msra.mxu0 %v29
  %126 = vmatprep.subr.mxu0 %v22
  %127 = vmatpush1.msra.mxu0 %v21
  %128 = vmatprep.subr.mxu0 0.0
  %129 = vmatpush2.msra.mxu0 0.0
  %130 = vmatprep.subr.mxu0 0.0
  %131 = vmatpush2.msra.mxu0 0.0
  %132 = vmatprep.subr.mxu0 0.0
  %133 = vmatpush2.msra.mxu0 0.0
  %134 = vmatprep.subr.mxu0 0.0
  %135 = vmatpush2.msra.mxu0 0.0
  %136 = vmatprep.subr.mxu0 0.0
  %137 = vmatpush2.msra.mxu0 0.0
  %138 = vmatprep.subr.mxu0 0.0
  %139 = vmatpush2.msra.mxu0 0.0
  %140 = vmatprep.subr.mxu0 0.0
  %141 = vmatpush2.msra.mxu0 0.0
  %142 = vmatprep.subr.mxu0 0.0
  %143 = vmatpush2.msra.mxu0 0.0
  %144 = vmatprep.subr.mxu0 0.0
  %145 = vmatpush2.msra.mxu0 0.0
  %146 = vmatprep.subr.mxu0 0.0
  %147 = vmatpush2.msra.mxu0 0.0
  %148 = vmatprep.subr.mxu0 0.0
  %149 = vmatpush2.msra.mxu0 0.0
  %150 = vmatprep.subr.mxu0 0.0
  %151 = vmatpush2.msra.mxu0 0.0
  %152 = vmatprep.subr.mxu0 0.0
  %153 = vmatpush2.msra.mxu0 0.0
  %154 = vmatprep.subr.mxu0 0.0
  %155 = vmatpush2.msra.mxu0 0.0
  %156 = vmatprep.subr.mxu0 0.0
  %157 = vmatpush2.msra.mxu0 0.0
  %158 = vmatprep.subr.mxu0 0.0
  %159 = vmatpush2.msra.mxu0 0.0
  %160 = vmatprep.mubr.f32.mxu0 0.0
  %161 = vmatmul.mubr.f32.gmra.mxu0 %v69
  %v162 = vpop.f32.mrf.mxu0
  %v163 = vadd.f32 %v65, %v162
  %v164 = vpop.f32.mrf.mxu0
  %v165 = vadd.f32 %v65, %v164
  %166 = vdwg.mxu0
  %167 = vmatprep.subr.mxu0 0.0
  %168 = vmatpush1.msra.mxu0 0.0
  %169 = vmatprep.subr.mxu0 0.0
  %170 = vmatpush1.msra.mxu0 0.0
  %171 = vmatprep.subr.mxu0 0.0
  %172 = vmatpush1.msra.mxu0 0.0
  %173 = vmatprep.subr.mxu0 0.0
  %174 = vmatpush1.msra.mxu0 0.0
  %175 = vmatprep.subr.mxu0 0.0
  %176 = vmatpush1.msra.mxu0 0.0
  %177 = vmatprep.subr.mxu0 0.0
  %178 = vmatpush1.msra.mxu0 0.0
  %179 = vmatprep.subr.mxu0 0.0
  %180 = vmatpush1.msra.mxu0 0.0
  %181 = vmatprep.subr.mxu0 0.0
  %182 = vmatpush1.msra.mxu0 0.0
  %183 = vmatprep.subr.mxu0 0.0
  %184 = vmatpush1.msra.mxu0 0.0
  %185 = vmatprep.subr.mxu0 0.0
  %186 = vmatpush1.msra.mxu0 0.0
  %187 = vmatprep.subr.mxu0 0.0
  %188 = vmatpush1.msra.mxu0 0.0
  %189 = vmatprep.subr.mxu0 %v82
  %190 = vmatpush1.msra.mxu0 %v79
  %191 = vmatprep.subr.mxu0 %v48
  %192 = vmatpush1.msra.mxu0 %v47
  %193 = vmatprep.subr.mxu0 %v40
  %194 = vmatpush1.msra.mxu0 %v39
  %195 = vmatprep.subr.mxu0 %v32
  %196 = vmatpush1.msra.mxu0 %v31
  %197 = vmatprep.subr.mxu0 %v24
  %198 = vmatpush1.msra.mxu0 %v23
  %199 = vmatprep.subr.mxu0 0.0
  %200 = vmatpush2.msra.mxu0 0.0
  %201 = vmatprep.subr.mxu0 0.0
  %202 = vmatpush2.msra.mxu0 0.0
  %203 = vmatprep.subr.mxu0 0.0
  %204 = vmatpush2.msra.mxu0 0.0
  %205 = vmatprep.subr.mxu0 0.0
  %206 = vmatpush2.msra.mxu0 0.0
  %207 = vmatprep.subr.mxu0 0.0
  %208 = vmatpush2.msra.mxu0 0.0
  %209 = vmatprep.subr.mxu0 0.0
  %210 = vmatpush2.msra.mxu0 0.0
  %211 = vmatprep.subr.mxu0 0.0
  %212 = vmatpush2.msra.mxu0 0.0
  %213 = vmatprep.subr.mxu0 0.0
  %214 = vmatpush2.msra.mxu0 0.0
  %215 = vmatprep.subr.mxu0 0.0
  %216 = vmatpush2.msra.mxu0 0.0
  %217 = vmatprep.subr.mxu0 0.0
  %218 = vmatpush2.msra.mxu0 0.0
  %219 = vmatprep.subr.mxu0 0.0
  %220 = vmatpush2.msra.mxu0 0.0
  %221 = vmatprep.subr.mxu0 0.0
  %222 = vmatpush2.msra.mxu0 0.0
  %223 = vmatprep.subr.mxu0 0.0
  %224 = vmatpush2.msra.mxu0 0.0
  %225 = vmatprep.subr.mxu0 0.0
  %226 = vmatpush2.msra.mxu0 0.0
  %227 = vmatprep.subr.mxu0 0.0
  %228 = vmatpush2.msra.mxu0 0.0
  %229 = vmatprep.subr.mxu0 0.0
  %230 = vmatpush2.msra.mxu0 0.0
  %231 = vmatprep.mubr.f32.mxu0 0.0
  %232 = vmatmul.mubr.f32.gmra.mxu0 %v69
  %v233 = vpop.f32.mrf.mxu0
  %v234 = vadd.f32 %v65, %v233
  %v235 = vpop.f32.mrf.mxu0
  %v236 = vadd.f32 %v65, %v235
  %237 = vdwg.mxu0
  %238 = vmatprep.subr.mxu0 0.0
  %239 = vmatpush1.msra.mxu0 0.0
  %240 = vmatprep.subr.mxu0 0.0
  %241 = vmatpush1.msra.mxu0 0.0
  %242 = vmatprep.subr.mxu0 0.0
  %243 = vmatpush1.msra.mxu0 0.0
  %244 = vmatprep.subr.mxu0 0.0
  %245 = vmatpush1.msra.mxu0 0.0
  %246 = vmatprep.subr.mxu0 0.0
  %247 = vmatpush1.msra.mxu0 0.0
  %248 = vmatprep.subr.mxu0 0.0
  %249 = vmatpush1.msra.mxu0 0.0
  %250 = vmatprep.subr.mxu0 0.0
  %251 = vmatpush1.msra.mxu0 0.0
  %252 = vmatprep.subr.mxu0 0.0
  %253 = vmatpush1.msra.mxu0 0.0
  %254 = vmatprep.subr.mxu0 0.0
  %255 = vmatpush1.msra.mxu0 0.0
  %256 = vmatprep.subr.mxu0 0.0
  %257 = vmatpush1.msra.mxu0 0.0
  %258 = vmatprep.subr.mxu0 0.0
  %259 = vmatpush1.msra.mxu0 0.0
  %260 = vmatprep.subr.mxu0 %v88
  %261 = vmatpush1.msra.mxu0 %v85
  %262 = vmatprep.subr.mxu0 %v50
  %263 = vmatpush1.msra.mxu0 %v49
  %264 = vmatprep.subr.mxu0 %v42
  %265 = vmatpush1.msra.mxu0 %v41
  %266 = vmatprep.subr.mxu0 %v34
  %267 = vmatpush1.msra.mxu0 %v33
  %268 = vmatprep.subr.mxu0 %v26
  %269 = vmatpush1.msra.mxu0 %v25
  %270 = vmatprep.subr.mxu0 0.0
  %271 = vmatpush2.msra.mxu0 0.0
  %272 = vmatprep.subr.mxu0 0.0
  %273 = vmatpush2.msra.mxu0 0.0
  %274 = vmatprep.subr.mxu0 0.0
  %275 = vmatpush2.msra.mxu0 0.0
  %276 = vmatprep.subr.mxu0 0.0
  %277 = vmatpush2.msra.mxu0 0.0
  %278 = vmatprep.subr.mxu0 0.0
  %279 = vmatpush2.msra.mxu0 0.0
  %280 = vmatprep.subr.mxu0 0.0
  %281 = vmatpush2.msra.mxu0 0.0
  %282 = vmatprep.subr.mxu0 0.0
  %283 = vmatpush2.msra.mxu0 0.0
  %284 = vmatprep.subr.mxu0 0.0
  %285 = vmatpush2.msra.mxu0 0.0
  %286 = vmatprep.subr.mxu0 0.0
  %287 = vmatpush2.msra.mxu0 0.0
  %288 = vmatprep.subr.mxu0 0.0
  %289 = vmatpush2.msra.mxu0 0.0
  %290 = vmatprep.subr.mxu0 0.0
  %291 = vmatpush2.msra.mxu0 0.0
  %292 = vmatprep.subr.mxu0 0.0
  %293 = vmatpush2.msra.mxu0 0.0
  %294 = vmatprep.subr.mxu0 0.0
  %295 = vmatpush2.msra.mxu0 0.0
  %296 = vmatprep.subr.mxu0 0.0
  %297 = vmatpush2.msra.mxu0 0.0
  %298 = vmatprep.subr.mxu0 0.0
  %299 = vmatpush2.msra.mxu0 0.0
  %300 = vmatprep.subr.mxu0 0.0
  %301 = vmatpush2.msra.mxu0 0.0
  %302 = vmatprep.mubr.f32.mxu0 0.0
  %303 = vmatmul.mubr.f32.gmra.mxu0 %v69
  %v304 = vpop.f32.mrf.mxu0
  %v305 = vadd.f32 %v65, %v304
  %v306 = vpop.f32.mrf.mxu0
  %v307 = vadd.f32 %v65, %v306
  %308 = vdwg.mxu0
  %309 = vmatprep.subr.mxu0 0.0
  %310 = vmatpush1.msra.mxu0 0.0
  %311 = vmatprep.subr.mxu0 0.0
  %312 = vmatpush1.msra.mxu0 0.0
  %313 = vmatprep.subr.mxu0 0.0
  %314 = vmatpush1.msra.mxu0 0.0
  %315 = vmatprep.subr.mxu0 0.0
  %316 = vmatpush1.msra.mxu0 0.0
  %317 = vmatprep.subr.mxu0 0.0
  %318 = vmatpush1.msra.mxu0 0.0
  %319 = vmatprep.subr.mxu0 0.0
  %320 = vmatpush1.msra.mxu0 0.0
  %321 = vmatprep.subr.mxu0 0.0
  %322 = vmatpush1.msra.mxu0 0.0
  %323 = vmatprep.subr.mxu0 0.0
  %324 = vmatpush1.msra.mxu0 0.0
  %325 = vmatprep.subr.mxu0 0.0
  %326 = vmatpush1.msra.mxu0 0.0
  %327 = vmatprep.subr.mxu0 0.0
  %328 = vmatpush1.msra.mxu0 0.0
  %329 = vmatprep.subr.mxu0 0.0
  %330 = vmatpush1.msra.mxu0 0.0
  %331 = vmatprep.subr.mxu0 %v94
  %332 = vmatpush1.msra.mxu0 %v91
  %333 = vmatprep.subr.mxu0 %v52
  %334 = vmatpush1.msra.mxu0 %v51
  %335 = vmatprep.subr.mxu0 %v44
  %336 = vmatpush1.msra.mxu0 %v43
  %337 = vmatprep.subr.mxu0 %v36
  %338 = vmatpush1.msra.mxu0 %v35
  %339 = vmatprep.subr.mxu0 %v28
  %340 = vmatpush1.msra.mxu0 %v27
  %341 = vmatprep.subr.mxu0 0.0
  %342 = vmatpush2.msra.mxu0 0.0
  %343 = vmatprep.subr.mxu0 0.0
  %344 = vmatpush2.msra.mxu0 0.0
  %345 = vmatprep.subr.mxu0 0.0
  %346 = vmatpush2.msra.mxu0 0.0
  %347 = vmatprep.subr.mxu0 0.0
  %348 = vmatpush2.msra.mxu0 0.0
  %349 = vmatprep.subr.mxu0 0.0
  %350 = vmatpush2.msra.mxu0 0.0
  %351 = vmatprep.subr.mxu0 0.0
  %352 = vmatpush2.msra.mxu0 0.0
  %353 = vmatprep.subr.mxu0 0.0
  %354 = vmatpush2.msra.mxu0 0.0
  %355 = vmatprep.subr.mxu0 0.0
  %356 = vmatpush2.msra.mxu0 0.0
  %357 = vmatprep.subr.mxu0 0.0
  %358 = vmatpush2.msra.mxu0 0.0
  %359 = vmatprep.subr.mxu0 0.0
  %360 = vmatpush2.msra.mxu0 0.0
  %361 = vmatprep.subr.mxu0 0.0
  %362 = vmatpush2.msra.mxu0 0.0
  %363 = vmatprep.subr.mxu0 0.0
  %364 = vmatpush2.msra.mxu0 0.0
  %365 = vmatprep.subr.mxu0 0.0
  %366 = vmatpush2.msra.mxu0 0.0
  %367 = vmatprep.subr.mxu0 0.0
  %368 = vmatpush2.msra.mxu0 0.0
  %369 = vmatprep.subr.mxu0 0.0
  %370 = vmatpush2.msra.mxu0 0.0
  %371 = vmatprep.subr.mxu0 0.0
  %372 = vmatpush2.msra.mxu0 0.0
  %373 = vmatprep.mubr.f32.mxu0 0.0
  %374 = vmatmul.mubr.f32.gmra.mxu0 %v69
  %v375 = vpop.f32.mrf.mxu0
  %v376 = vadd.f32 %v65, %v375
  %v377 = vpop.f32.mrf.mxu0
  %v378 = vadd.f32 %v65, %v377
  %379 = vdwg.mxu0
  %v380 = vmax.f32 %v163, 0.0
  %v381 = vmax.f32 %v165, 0.0
  %v382 = vmax.f32 %v234, 0.0
  %v383 = vmax.f32 %v236, 0.0
  %v384 = vmax.f32 %v305, 0.0
  %v385 = vmax.f32 %v307, 0.0
  %v386 = vmax.f32 %v376, 0.0
  %v387 = vmax.f32 %v378, 0.0
  %v390 = vcombine.low %v380, %v381
  %v392 = vunpack.c.l.s4 1966171168
  %v393 = vunpack.c.0.s8 %v392
  %v394 = vlaneseq
  %v395 = vshrl.u32 %v394, 7
  %v396 = vsub.s32 %v393, %v395
  %v397 = vrot.slane %v390, %v396
  %v399 = vunpack.c.l.s4 1966171168
  %v400 = vunpack.c.0.s8 %v399
  %v401 = vlaneseq
  %v402 = vshrl.u32 %v401, 7
  %v403 = vsub.s32 %v400, %v402
  %v404 = vrot.slane %v397, %v403
  %v406 = vlaneseq
  %vm407 = vcmp.ge.s32.totalorder %v406, 0
  %vm408 = vcmp.lt.s32.totalorder %v406, 256
  %vm409 = vmand %vm407, %vm408
  %410 = vst.msk [vmem:[#allocation2] ss:$4 sm:$0x3] %vm409, %v404
  %v411 = vcombine.high %v397, %v397
  %v413 = vunpack.c.l.s4 1966171168
  %v414 = vunpack.c.0.s8 %v413
  %v415 = vlaneseq
  %v416 = vshrl.u32 %v415, 7
  %v417 = vsub.s32 %v414, %v416
  %v418 = vrot.slane %v411, %v417
  %s420 = scalar_lea.vmem [#allocation2], 8
  %421 = vst.msk [vmem:[%s420] ss:$4 sm:$0x3] %vm409, %v418
  %v422 = vcombine.high %v404, %v404
  %s424 = scalar_lea.vmem [#allocation2], 16
  %425 = vst.msk [vmem:[%s424] ss:$4 sm:$0x3] %vm409, %v422
  %v426 = vcombine.high %v418, %v418
  %s428 = scalar_lea.vmem [#allocation2], 24
  %429 = vst.msk [vmem:[%s428] ss:$4 sm:$0x3] %vm409, %v426
  %v430 = vcombine.high %v380, %v381
  %v432 = vunpack.c.l.s4 1966171168
  %v433 = vunpack.c.0.s8 %v432
  %v434 = vlaneseq
  %v435 = vshrl.u32 %v434, 7
  %v436 = vsub.s32 %v433, %v435
  %v437 = vrot.slane %v430, %v436
  %v439 = vunpack.c.l.s4 1966171168
  %v440 = vunpack.c.0.s8 %v439
  %v441 = vlaneseq
  %v442 = vshrl.u32 %v441, 7
  %v443 = vsub.s32 %v440, %v442
  %v444 = vrot.slane %v437, %v443
  %s446 = scalar_lea.vmem [#allocation2], 32
  %447 = vst.msk [vmem:[%s446] ss:$4 sm:$0x3] %vm409, %v444
  %v448 = vcombine.high %v437, %v437
  %v450 = vunpack.c.l.s4 1966171168
  %v451 = vunpack.c.0.s8 %v450
  %v452 = vlaneseq
  %v453 = vshrl.u32 %v452, 7
  %v454 = vsub.s32 %v451, %v453
  %v455 = vrot.slane %v448, %v454
  %s457 = scalar_lea.vmem [#allocation2], 40
  %458 = vst.msk [vmem:[%s457] ss:$4 sm:$0x3] %vm409, %v455
  %v459 = vcombine.high %v444, %v444
  %s461 = scalar_lea.vmem [#allocation2], 48
  %462 = vst.msk [vmem:[%s461] ss:$4 sm:$0x3] %vm409, %v459
  %v463 = vcombine.high %v455, %v455
  %s465 = scalar_lea.vmem [#allocation2], 56
  %466 = vst.msk [vmem:[%s465] ss:$4 sm:$0x3] %vm409, %v463
  %v469 = vcombine.low %v382, %v383
  %v471 = vunpack.c.l.s4 1966171168
  %v472 = vunpack.c.0.s8 %v471
  %v473 = vlaneseq
  %v474 = vshrl.u32 %v473, 7
  %v475 = vsub.s32 %v472, %v474
  %v476 = vrot.slane %v469, %v475
  %v478 = vunpack.c.l.s4 1966171168
  %v479 = vunpack.c.0.s8 %v478
  %v480 = vlaneseq
  %v481 = vshrl.u32 %v480, 7
  %v482 = vsub.s32 %v479, %v481
  %v483 = vrot.slane %v476, %v482
  %s485 = scalar_lea.vmem [#allocation2], 1
  %486 = vst.msk [vmem:[%s485] ss:$4 sm:$0x3] %vm409, %v483
  %v487 = vcombine.high %v476, %v476
  %v489 = vunpack.c.l.s4 1966171168
  %v490 = vunpack.c.0.s8 %v489
  %v491 = vlaneseq
  %v492 = vshrl.u32 %v491, 7
  %v493 = vsub.s32 %v490, %v492
  %v494 = vrot.slane %v487, %v493
  %s496 = scalar_lea.vmem [#allocation2], 9
  %497 = vst.msk [vmem:[%s496] ss:$4 sm:$0x3] %vm409, %v494
  %v498 = vcombine.high %v483, %v483
  %s500 = scalar_lea.vmem [#allocation2], 17
  %501 = vst.msk [vmem:[%s500] ss:$4 sm:$0x3] %vm409, %v498
  %v502 = vcombine.high %v494, %v494
  %s504 = scalar_lea.vmem [#allocation2], 25
  %505 = vst.msk [vmem:[%s504] ss:$4 sm:$0x3] %vm409, %v502
  %v506 = vcombine.high %v382, %v383
  %v508 = vunpack.c.l.s4 1966171168
  %v509 = vunpack.c.0.s8 %v508
  %v510 = vlaneseq
  %v511 = vshrl.u32 %v510, 7
  %v512 = vsub.s32 %v509, %v511
  %v513 = vrot.slane %v506, %v512
  %v515 = vunpack.c.l.s4 1966171168
  %v516 = vunpack.c.0.s8 %v515
  %v517 = vlaneseq
  %v518 = vshrl.u32 %v517, 7
  %v519 = vsub.s32 %v516, %v518
  %v520 = vrot.slane %v513, %v519
  %s522 = scalar_lea.vmem [#allocation2], 33
  %523 = vst.msk [vmem:[%s522] ss:$4 sm:$0x3] %vm409, %v520
  %v524 = vcombine.high %v513, %v513
  %v526 = vunpack.c.l.s4 1966171168
  %v527 = vunpack.c.0.s8 %v526
  %v528 = vlaneseq
  %v529 = vshrl.u32 %v528, 7
  %v530 = vsub.s32 %v527, %v529
  %v531 = vrot.slane %v524, %v530
  %s533 = scalar_lea.vmem [#allocation2], 41
  %534 = vst.msk [vmem:[%s533] ss:$4 sm:$0x3] %vm409, %v531
  %v535 = vcombine.high %v520, %v520
  %s537 = scalar_lea.vmem [#allocation2], 49
  %538 = vst.msk [vmem:[%s537] ss:$4 sm:$0x3] %vm409, %v535
  %v539 = vcombine.high %v531, %v531
  %s541 = scalar_lea.vmem [#allocation2], 57
  %542 = vst.msk [vmem:[%s541] ss:$4 sm:$0x3] %vm409, %v539
  %v545 = vcombine.low %v384, %v385
  %v547 = vunpack.c.l.s4 1966171168
  %v548 = vunpack.c.0.s8 %v547
  %v549 = vlaneseq
  %v550 = vshrl.u32 %v549, 7
  %v551 = vsub.s32 %v548, %v550
  %v552 = vrot.slane %v545, %v551
  %v554 = vunpack.c.l.s4 1966171168
  %v555 = vunpack.c.0.s8 %v554
  %v556 = vlaneseq
  %v557 = vshrl.u32 %v556, 7
  %v558 = vsub.s32 %v555, %v557
  %v559 = vrot.slane %v552, %v558
  %s561 = scalar_lea.vmem [#allocation2], 2
  %562 = vst.msk [vmem:[%s561] ss:$4 sm:$0x3] %vm409, %v559
  %v563 = vcombine.high %v552, %v552
  %v565 = vunpack.c.l.s4 1966171168
  %v566 = vunpack.c.0.s8 %v565
  %v567 = vlaneseq
  %v568 = vshrl.u32 %v567, 7
  %v569 = vsub.s32 %v566, %v568
  %v570 = vrot.slane %v563, %v569
  %s572 = scalar_lea.vmem [#allocation2], 10
  %573 = vst.msk [vmem:[%s572] ss:$4 sm:$0x3] %vm409, %v570
  %v574 = vcombine.high %v559, %v559
  %s576 = scalar_lea.vmem [#allocation2], 18
  %577 = vst.msk [vmem:[%s576] ss:$4 sm:$0x3] %vm409, %v574
  %v578 = vcombine.high %v570, %v570
  %s580 = scalar_lea.vmem [#allocation2], 26
  %581 = vst.msk [vmem:[%s580] ss:$4 sm:$0x3] %vm409, %v578
  %v582 = vcombine.high %v384, %v385
  %v584 = vunpack.c.l.s4 1966171168
  %v585 = vunpack.c.0.s8 %v584
  %v586 = vlaneseq
  %v587 = vshrl.u32 %v586, 7
  %v588 = vsub.s32 %v585, %v587
  %v589 = vrot.slane %v582, %v588
  %v591 = vunpack.c.l.s4 1966171168
  %v592 = vunpack.c.0.s8 %v591
  %v593 = vlaneseq
  %v594 = vshrl.u32 %v593, 7
  %v595 = vsub.s32 %v592, %v594
  %v596 = vrot.slane %v589, %v595
  %s598 = scalar_lea.vmem [#allocation2], 34
  %599 = vst.msk [vmem:[%s598] ss:$4 sm:$0x3] %vm409, %v596
  %v600 = vcombine.high %v589, %v589
  %v602 = vunpack.c.l.s4 1966171168
  %v603 = vunpack.c.0.s8 %v602
  %v604 = vlaneseq
  %v605 = vshrl.u32 %v604, 7
  %v606 = vsub.s32 %v603, %v605
  %v607 = vrot.slane %v600, %v606
  %s609 = scalar_lea.vmem [#allocation2], 42
  %610 = vst.msk [vmem:[%s609] ss:$4 sm:$0x3] %vm409, %v607
  %v611 = vcombine.high %v596, %v596
  %s613 = scalar_lea.vmem [#allocation2], 50
  %614 = vst.msk [vmem:[%s613] ss:$4 sm:$0x3] %vm409, %v611
  %v615 = vcombine.high %v607, %v607
  %s617 = scalar_lea.vmem [#allocation2], 58
  %618 = vst.msk [vmem:[%s617] ss:$4 sm:$0x3] %vm409, %v615
  %v621 = vcombine.low %v386, %v387
  %v623 = vunpack.c.l.s4 1966171168
  %v624 = vunpack.c.0.s8 %v623
  %v625 = vlaneseq
  %v626 = vshrl.u32 %v625, 7
  %v627 = vsub.s32 %v624, %v626
  %v628 = vrot.slane %v621, %v627
  %v630 = vunpack.c.l.s4 1966171168
  %v631 = vunpack.c.0.s8 %v630
  %v632 = vlaneseq
  %v633 = vshrl.u32 %v632, 7
  %v634 = vsub.s32 %v631, %v633
  %v635 = vrot.slane %v628, %v634
  %s637 = scalar_lea.vmem [#allocation2], 3
  %638 = vst.msk [vmem:[%s637] ss:$4 sm:$0x3] %vm409, %v635
  %v639 = vcombine.high %v628, %v628
  %v641 = vunpack.c.l.s4 1966171168
  %v642 = vunpack.c.0.s8 %v641
  %v643 = vlaneseq
  %v644 = vshrl.u32 %v643, 7
  %v645 = vsub.s32 %v642, %v644
  %v646 = vrot.slane %v639, %v645
  %s648 = scalar_lea.vmem [#allocation2], 11
  %649 = vst.msk [vmem:[%s648] ss:$4 sm:$0x3] %vm409, %v646
  %v650 = vcombine.high %v635, %v635
  %s652 = scalar_lea.vmem [#allocation2], 19
  %653 = vst.msk [vmem:[%s652] ss:$4 sm:$0x3] %vm409, %v650
  %v654 = vcombine.high %v646, %v646
  %s656 = scalar_lea.vmem [#allocation2], 27
  %657 = vst.msk [vmem:[%s656] ss:$4 sm:$0x3] %vm409, %v654
  %v658 = vcombine.high %v386, %v387
  %v660 = vunpack.c.l.s4 1966171168
  %v661 = vunpack.c.0.s8 %v660
  %v662 = vlaneseq
  %v663 = vshrl.u32 %v662, 7
  %v664 = vsub.s32 %v661, %v663
  %v665 = vrot.slane %v658, %v664
  %v667 = vunpack.c.l.s4 1966171168
  %v668 = vunpack.c.0.s8 %v667
  %v669 = vlaneseq
  %v670 = vshrl.u32 %v669, 7
  %v671 = vsub.s32 %v668, %v670
  %v672 = vrot.slane %v665, %v671
  %s674 = scalar_lea.vmem [#allocation2], 35
  %675 = vst.msk [vmem:[%s674] ss:$4 sm:$0x3] %vm409, %v672
  %v676 = vcombine.high %v665, %v665
  %v678 = vunpack.c.l.s4 1966171168
  %v679 = vunpack.c.0.s8 %v678
  %v680 = vlaneseq
  %v681 = vshrl.u32 %v680, 7
  %v682 = vsub.s32 %v679, %v681
  %v683 = vrot.slane %v676, %v682
  %s685 = scalar_lea.vmem [#allocation2], 43
  %686 = vst.msk [vmem:[%s685] ss:$4 sm:$0x3] %vm409, %v683
  %v687 = vcombine.high %v672, %v672
  %s689 = scalar_lea.vmem [#allocation2], 51
  %690 = vst.msk [vmem:[%s689] ss:$4 sm:$0x3] %vm409, %v687
  %v691 = vcombine.high %v683, %v683
  %s693 = scalar_lea.vmem [#allocation2], 59
  %694 = vst.msk [vmem:[%s693] ss:$4 sm:$0x3] %vm409, %v691
  %v695 = vld [vmem:[#allocation2] sm:$0xff]
  %v696 = vld [vmem:[#allocation2 + $0x8] sm:$0xff]
  %v697 = vld [vmem:[#allocation2 + $0x10] sm:$0xff]
  %v698 = vld [vmem:[#allocation2 + $0x18] sm:$0xff]
  %v699 = vld [vmem:[#allocation2 + $0x20] sm:$0xff]
  %v700 = vld [vmem:[#allocation2 + $0x28] sm:$0xff]
  %v701 = vld [vmem:[#allocation2 + $0x30] sm:$0xff]
  %v702 = vld [vmem:[#allocation2 + $0x38] sm:$0xff]
  %v703 = vld [vmem:[%s3] sm:$0xff]
  %v704 = vld [vmem:[%s3 + $0x8] sm:$0xff]
  %v705 = vld [vmem:[%s3 + $0x10] sm:$0xff]
  %v706 = vld [vmem:[%s3 + $0x18] sm:$0xff]
  %v707 = vld [vmem:[%s3 + $0x20] sm:$0xff]
  %v708 = vld [vmem:[%s3 + $0x28] sm:$0xff]
  %v709 = vld [vmem:[%s3 + $0x30] sm:$0xff]
  %v710 = vld [vmem:[%s3 + $0x38] sm:$0xff]
  %v711 = vld [vmem:[%s3 + $0x40] sm:$0xff]
  %v712 = vld [vmem:[%s3 + $0x48] sm:$0xff]
  %v713 = vld [vmem:[%s3 + $0x50] sm:$0xff]
  %v714 = vld [vmem:[%s3 + $0x58] sm:$0xff]
  %v715 = vld [vmem:[%s3 + $0x60] sm:$0xff]
  %v716 = vld [vmem:[%s3 + $0x68] sm:$0xff]
  %v717 = vld [vmem:[%s3 + $0x70] sm:$0xff]
  %v718 = vld [vmem:[%s3 + $0x78] sm:$0xff]
  %v719 = vld [vmem:[%s3 + $0x80] sm:$0xff]
  %v720 = vld [vmem:[%s3 + $0x88] sm:$0xff]
  %v721 = vld [vmem:[%s3 + $0x90] sm:$0xff]
  %v722 = vld [vmem:[%s3 + $0x98] sm:$0xff]
  %v723 = vld [vmem:[%s3 + $0xa0] sm:$0xff]
  %v724 = vld [vmem:[%s3 + $0xa8] sm:$0xff]
  %v725 = vld [vmem:[%s3 + $0xb0] sm:$0xff]
  %v726 = vld [vmem:[%s3 + $0xb8] sm:$0xff]
  %v727 = vld [vmem:[%s3 + $0xc0] sm:$0xff]
  %v728 = vld [vmem:[%s3 + $0xc8] sm:$0xff]
  %v729 = vld [vmem:[%s3 + $0xd0] sm:$0xff]
  %v730 = vld [vmem:[%s3 + $0xd8] sm:$0xff]
  %v731 = vld [vmem:[%s3 + $0xe0] sm:$0xff]
  %v732 = vld [vmem:[%s3 + $0xe8] sm:$0xff]
  %v733 = vld [vmem:[%s3 + $0xf0] sm:$0xff]
  %v734 = vld [vmem:[%s3 + $0xf8] sm:$0xff]
  %v735 = vld [vmem:[%s3 + $0x100] sm:$0xff]
  %v736 = vld [vmem:[%s3 + $0x108] sm:$0xff]
  %v737 = vld [vmem:[%s3 + $0x110] sm:$0xff]
  %v738 = vld [vmem:[%s3 + $0x118] sm:$0xff]
  %v739 = vld [vmem:[%s3 + $0x120] sm:$0xff]
  %v740 = vld [vmem:[%s3 + $0x128] sm:$0xff]
  %v741 = vld [vmem:[%s3 + $0x130] sm:$0xff]
  %v742 = vld [vmem:[%s3 + $0x138] sm:$0xff]
  %v743 = vld [vmem:[%s3 + $0x140] sm:$0xff]
  %v744 = vld [vmem:[%s3 + $0x148] sm:$0xff]
  %v745 = vld [vmem:[%s3 + $0x150] sm:$0xff]
  %v746 = vld [vmem:[%s3 + $0x158] sm:$0xff]
  %v747 = vld [vmem:[%s3 + $0x160] sm:$0xff]
  %v748 = vld [vmem:[%s3 + $0x168] sm:$0xff]
  %v749 = vld [vmem:[%s3 + $0x170] sm:$0xff]
  %v750 = vld [vmem:[%s3 + $0x178] sm:$0xff]
  %v751 = vld [vmem:[%s3 + $0x180] sm:$0xff]
  %v752 = vld [vmem:[%s3 + $0x188] sm:$0xff]
  %v753 = vld [vmem:[%s3 + $0x190] sm:$0xff]
  %v754 = vld [vmem:[%s3 + $0x198] sm:$0xff]
  %v755 = vld [vmem:[%s3 + $0x1a0] sm:$0xff]
  %v756 = vld [vmem:[%s3 + $0x1a8] sm:$0xff]
  %v757 = vld [vmem:[%s3 + $0x1b0] sm:$0xff]
  %v758 = vld [vmem:[%s3 + $0x1b8] sm:$0xff]
  %v759 = vld [vmem:[%s3 + $0x1c0] sm:$0xff]
  %v760 = vld [vmem:[%s3 + $0x1c8] sm:$0xff]
  %v761 = vld [vmem:[%s3 + $0x1d0] sm:$0xff]
  %v762 = vld [vmem:[%s3 + $0x1d8] sm:$0xff]
  %v763 = vld [vmem:[%s3 + $0x1e0] sm:$0xff]
  %v764 = vld [vmem:[%s3 + $0x1e8] sm:$0xff]
  %v765 = vld [vmem:[%s3 + $0x1f0] sm:$0xff]
  %v766 = vld [vmem:[%s3 + $0x1f8] sm:$0xff]
  %v767 = vld [vmem:[%s3 + $0x200] sm:$0xff]
  %v768 = vld [vmem:[%s3 + $0x208] sm:$0xff]
  %v769 = vld [vmem:[%s3 + $0x210] sm:$0xff]
  %v770 = vld [vmem:[%s3 + $0x218] sm:$0xff]
  %v771 = vld [vmem:[%s3 + $0x220] sm:$0xff]
  %v772 = vld [vmem:[%s3 + $0x228] sm:$0xff]
  %v773 = vld [vmem:[%s3 + $0x230] sm:$0xff]
  %v774 = vld [vmem:[%s3 + $0x238] sm:$0xff]
  %v775 = vld [vmem:[%s3 + $0x240] sm:$0xff]
  %v776 = vld [vmem:[%s3 + $0x248] sm:$0xff]
  %v777 = vld [vmem:[%s3 + $0x250] sm:$0xff]
  %v778 = vld [vmem:[%s3 + $0x258] sm:$0xff]
  %v779 = vld [vmem:[%s3 + $0x260] sm:$0xff]
  %v780 = vld [vmem:[%s3 + $0x268] sm:$0xff]
  %v781 = vld [vmem:[%s3 + $0x270] sm:$0xff]
  %v782 = vld [vmem:[%s3 + $0x278] sm:$0xff]
  %v783 = vld [vmem:[%s3 + $0x280] sm:$0xff]
  %v784 = vld [vmem:[%s3 + $0x288] sm:$0xff]
  %v785 = vld [vmem:[%s3 + $0x290] sm:$0xff]
  %v786 = vld [vmem:[%s3 + $0x298] sm:$0xff]
  %v787 = vld [vmem:[%s3 + $0x2a0] sm:$0xff]
  %v788 = vld [vmem:[%s3 + $0x2a8] sm:$0xff]
  %v789 = vld [vmem:[%s3 + $0x2b0] sm:$0xff]
  %v790 = vld [vmem:[%s3 + $0x2b8] sm:$0xff]
  %v791 = vld [vmem:[%s3 + $0x2c0] sm:$0xff]
  %v792 = vld [vmem:[%s3 + $0x2c8] sm:$0xff]
  %v793 = vld [vmem:[%s3 + $0x2d0] sm:$0xff]
  %v794 = vld [vmem:[%s3 + $0x2d8] sm:$0xff]
  %v795 = vld [vmem:[%s3 + $0x2e0] sm:$0xff]
  %v796 = vld [vmem:[%s3 + $0x2e8] sm:$0xff]
  %v797 = vld [vmem:[%s3 + $0x2f0] sm:$0xff]
  %v798 = vld [vmem:[%s3 + $0x2f8] sm:$0xff]
  %v799 = vld [vmem:[%s3 + $0x300] sm:$0xff]
  %v800 = vld [vmem:[%s3 + $0x308] sm:$0xff]
  %v801 = vld [vmem:[%s3 + $0x310] sm:$0xff]
  %v802 = vld [vmem:[%s3 + $0x318] sm:$0xff]
  %v803 = vld [vmem:[%s3 + $0x320] sm:$0xff]
  %v804 = vld [vmem:[%s3 + $0x328] sm:$0xff]
  %v805 = vld [vmem:[%s3 + $0x330] sm:$0xff]
  %v806 = vld [vmem:[%s3 + $0x338] sm:$0xff]
  %v807 = vld [vmem:[%s3 + $0x340] sm:$0xff]
  %v808 = vld [vmem:[%s3 + $0x348] sm:$0xff]
  %v809 = vld [vmem:[%s3 + $0x350] sm:$0xff]
  %v810 = vld [vmem:[%s3 + $0x358] sm:$0xff]
  %v811 = vld [vmem:[%s3 + $0x360] sm:$0xff]
  %v812 = vld [vmem:[%s3 + $0x368] sm:$0xff]
  %v813 = vld [vmem:[%s3 + $0x370] sm:$0xff]
  %v814 = vld [vmem:[%s3 + $0x378] sm:$0xff]
  %v815 = vld [vmem:[%s3 + $0x380] sm:$0xff]
  %v816 = vld [vmem:[%s3 + $0x388] sm:$0xff]
  %v817 = vld [vmem:[%s3 + $0x390] sm:$0xff]
  %v818 = vld [vmem:[%s3 + $0x398] sm:$0xff]
  %v819 = vld [vmem:[%s3 + $0x3a0] sm:$0xff]
  %v820 = vld [vmem:[%s3 + $0x3a8] sm:$0xff]
  %v821 = vld [vmem:[%s3 + $0x3b0] sm:$0xff]
  %v822 = vld [vmem:[%s3 + $0x3b8] sm:$0xff]
  %v823 = vld [vmem:[%s3 + $0x3c0] sm:$0xff]
  %v824 = vld [vmem:[%s3 + $0x3c8] sm:$0xff]
  %v825 = vld [vmem:[%s3 + $0x3d0] sm:$0xff]
  %v826 = vld [vmem:[%s3 + $0x3d8] sm:$0xff]
  %v827 = vld [vmem:[%s3 + $0x3e0] sm:$0xff]
  %v828 = vld [vmem:[%s3 + $0x3e8] sm:$0xff]
  %v829 = vld [vmem:[%s3 + $0x3f0] sm:$0xff]
  %v830 = vld [vmem:[%s3 + $0x3f8] sm:$0xff]
  %v831 = vld [vmem:[%s3 + $0x400] sm:$0xff]
  %v832 = vld [vmem:[%s3 + $0x408] sm:$0xff]
  %v833 = vld [vmem:[%s3 + $0x410] sm:$0xff]
  %v834 = vld [vmem:[%s3 + $0x418] sm:$0xff]
  %v835 = vld [vmem:[%s3 + $0x420] sm:$0xff]
  %v836 = vld [vmem:[%s3 + $0x428] sm:$0xff]
  %v837 = vld [vmem:[%s3 + $0x430] sm:$0xff]
  %v838 = vld [vmem:[%s3 + $0x438] sm:$0xff]
  %v839 = vld [vmem:[%s3 + $0x440] sm:$0xff]
  %v840 = vld [vmem:[%s3 + $0x448] sm:$0xff]
  %v841 = vld [vmem:[%s3 + $0x450] sm:$0xff]
  %v842 = vld [vmem:[%s3 + $0x458] sm:$0xff]
  %v843 = vld [vmem:[%s3 + $0x460] sm:$0xff]
  %v844 = vld [vmem:[%s3 + $0x468] sm:$0xff]
  %v845 = vld [vmem:[%s3 + $0x470] sm:$0xff]
  %v846 = vld [vmem:[%s3 + $0x478] sm:$0xff]
  %v847 = vld [vmem:[%s3 + $0x480] sm:$0xff]
  %v848 = vld [vmem:[%s3 + $0x488] sm:$0xff]
  %v849 = vld [vmem:[%s3 + $0x490] sm:$0xff]
  %v850 = vld [vmem:[%s3 + $0x498] sm:$0xff]
  %v851 = vld [vmem:[%s3 + $0x4a0] sm:$0xff]
  %v852 = vld [vmem:[%s3 + $0x4a8] sm:$0xff]
  %v853 = vld [vmem:[%s3 + $0x4b0] sm:$0xff]
  %v854 = vld [vmem:[%s3 + $0x4b8] sm:$0xff]
  %v855 = vld [vmem:[%s3 + $0x4c0] sm:$0xff]
  %v856 = vld [vmem:[%s3 + $0x4c8] sm:$0xff]
  %v857 = vld [vmem:[%s3 + $0x4d0] sm:$0xff]
  %v858 = vld [vmem:[%s3 + $0x4d8] sm:$0xff]
  %v859 = vld [vmem:[%s3 + $0x4e0] sm:$0xff]
  %v860 = vld [vmem:[%s3 + $0x4e8] sm:$0xff]
  %v861 = vld [vmem:[%s3 + $0x4f0] sm:$0xff]
  %v862 = vld [vmem:[%s3 + $0x4f8] sm:$0xff]
  %v863 = vld [vmem:[%s3 + $0x500] sm:$0xff]
  %v864 = vld [vmem:[%s3 + $0x508] sm:$0xff]
  %v865 = vld [vmem:[%s3 + $0x510] sm:$0xff]
  %v866 = vld [vmem:[%s3 + $0x518] sm:$0xff]
  %v867 = vld [vmem:[%s3 + $0x520] sm:$0xff]
  %v868 = vld [vmem:[%s3 + $0x528] sm:$0xff]
  %v869 = vld [vmem:[%s3 + $0x530] sm:$0xff]
  %v870 = vld [vmem:[%s3 + $0x538] sm:$0xff]
  %v871 = vld [vmem:[%s3 + $0x540] sm:$0xff]
  %v872 = vld [vmem:[%s3 + $0x548] sm:$0xff]
  %v873 = vld [vmem:[%s3 + $0x550] sm:$0xff]
  %v874 = vld [vmem:[%s3 + $0x558] sm:$0xff]
  %v875 = vld [vmem:[%s3 + $0x560] sm:$0xff]
  %v876 = vld [vmem:[%s3 + $0x568] sm:$0xff]
  %v877 = vld [vmem:[%s3 + $0x570] sm:$0xff]
  %v878 = vld [vmem:[%s3 + $0x578] sm:$0xff]
  %v879 = vld [vmem:[%s3 + $0x580] sm:$0xff]
  %v880 = vld [vmem:[%s3 + $0x588] sm:$0xff]
  %v881 = vld [vmem:[%s3 + $0x590] sm:$0xff]
  %v882 = vld [vmem:[%s3 + $0x598] sm:$0xff]
  %v883 = vld [vmem:[%s3 + $0x5a0] sm:$0xff]
  %v884 = vld [vmem:[%s3 + $0x5a8] sm:$0xff]
  %v885 = vld [vmem:[%s3 + $0x5b0] sm:$0xff]
  %v886 = vld [vmem:[%s3 + $0x5b8] sm:$0xff]
  %v887 = vld [vmem:[%s3 + $0x5c0] sm:$0xff]
  %v888 = vld [vmem:[%s3 + $0x5c8] sm:$0xff]
  %v889 = vld [vmem:[%s3 + $0x5d0] sm:$0xff]
  %v890 = vld [vmem:[%s3 + $0x5d8] sm:$0xff]
  %v891 = vld [vmem:[%s3 + $0x5e0] sm:$0xff]
  %v892 = vld [vmem:[%s3 + $0x5e8] sm:$0xff]
  %v893 = vld [vmem:[%s3 + $0x5f0] sm:$0xff]
  %v894 = vld [vmem:[%s3 + $0x5f8] sm:$0xff]
  %v895 = vld [vmem:[%s3 + $0x600] sm:$0xff]
  %v896 = vld [vmem:[%s3 + $0x608] sm:$0xff]
  %v897 = vld [vmem:[%s3 + $0x610] sm:$0xff]
  %v898 = vld [vmem:[%s3 + $0x618] sm:$0xff]
  %v899 = vld [vmem:[%s3 + $0x620] sm:$0xff]
  %v900 = vld [vmem:[%s3 + $0x628] sm:$0xff]
  %v901 = vld [vmem:[%s3 + $0x630] sm:$0xff]
  %v902 = vld [vmem:[%s3 + $0x638] sm:$0xff]
  %v903 = vld [vmem:[%s3 + $0x640] sm:$0xff]
  %v904 = vld [vmem:[%s3 + $0x648] sm:$0xff]
  %v905 = vld [vmem:[%s3 + $0x650] sm:$0xff]
  %v906 = vld [vmem:[%s3 + $0x658] sm:$0xff]
  %v907 = vld [vmem:[%s3 + $0x660] sm:$0xff]
  %v908 = vld [vmem:[%s3 + $0x668] sm:$0xff]
  %v909 = vld [vmem:[%s3 + $0x670] sm:$0xff]
  %v910 = vld [vmem:[%s3 + $0x678] sm:$0xff]
  %v911 = vld [vmem:[%s3 + $0x680] sm:$0xff]
  %v912 = vld [vmem:[%s3 + $0x688] sm:$0xff]
  %v913 = vld [vmem:[%s3 + $0x690] sm:$0xff]
  %v914 = vld [vmem:[%s3 + $0x698] sm:$0xff]
  %v915 = vld [vmem:[%s3 + $0x6a0] sm:$0xff]
  %v916 = vld [vmem:[%s3 + $0x6a8] sm:$0xff]
  %v917 = vld [vmem:[%s3 + $0x6b0] sm:$0xff]
  %v918 = vld [vmem:[%s3 + $0x6b8] sm:$0xff]
  %v919 = vld [vmem:[%s3 + $0x6c0] sm:$0xff]
  %v920 = vld [vmem:[%s3 + $0x6c8] sm:$0xff]
  %v921 = vld [vmem:[%s3 + $0x6d0] sm:$0xff]
  %v922 = vld [vmem:[%s3 + $0x6d8] sm:$0xff]
  %v923 = vld [vmem:[%s3 + $0x6e0] sm:$0xff]
  %v924 = vld [vmem:[%s3 + $0x6e8] sm:$0xff]
  %v925 = vld [vmem:[%s3 + $0x6f0] sm:$0xff]
  %v926 = vld [vmem:[%s3 + $0x6f8] sm:$0xff]
  %v927 = vld [vmem:[%s3 + $0x700] sm:$0xff]
  %v928 = vld [vmem:[%s3 + $0x708] sm:$0xff]
  %v929 = vld [vmem:[%s3 + $0x710] sm:$0xff]
  %v930 = vld [vmem:[%s3 + $0x718] sm:$0xff]
  %v931 = vld [vmem:[%s3 + $0x720] sm:$0xff]
  %v932 = vld [vmem:[%s3 + $0x728] sm:$0xff]
  %v933 = vld [vmem:[%s3 + $0x730] sm:$0xff]
  %v934 = vld [vmem:[%s3 + $0x738] sm:$0xff]
  %v935 = vld [vmem:[%s3 + $0x740] sm:$0xff]
  %v936 = vld [vmem:[%s3 + $0x748] sm:$0xff]
  %v937 = vld [vmem:[%s3 + $0x750] sm:$0xff]
  %v938 = vld [vmem:[%s3 + $0x758] sm:$0xff]
  %v939 = vld [vmem:[%s3 + $0x760] sm:$0xff]
  %v940 = vld [vmem:[%s3 + $0x768] sm:$0xff]
  %v941 = vld [vmem:[%s3 + $0x770] sm:$0xff]
  %v942 = vld [vmem:[%s3 + $0x778] sm:$0xff]
  %v943 = vld [vmem:[%s3 + $0x780] sm:$0xff]
  %v944 = vld [vmem:[%s3 + $0x788] sm:$0xff]
  %v945 = vld [vmem:[%s3 + $0x790] sm:$0xff]
  %v946 = vld [vmem:[%s3 + $0x798] sm:$0xff]
  %v947 = vld [vmem:[%s3 + $0x7a0] sm:$0xff]
  %v948 = vld [vmem:[%s3 + $0x7a8] sm:$0xff]
  %v949 = vld [vmem:[%s3 + $0x7b0] sm:$0xff]
  %v950 = vld [vmem:[%s3 + $0x7b8] sm:$0xff]
  %v951 = vld [vmem:[%s3 + $0x7c0] sm:$0xff]
  %v952 = vld [vmem:[%s3 + $0x7c8] sm:$0xff]
  %v953 = vld [vmem:[%s3 + $0x7d0] sm:$0xff]
  %v954 = vld [vmem:[%s3 + $0x7d8] sm:$0xff]
  %v955 = vld [vmem:[%s3 + $0x7e0] sm:$0xff]
  %v956 = vld [vmem:[%s3 + $0x7e8] sm:$0xff]
  %v957 = vld [vmem:[%s3 + $0x7f0] sm:$0xff]
  %v958 = vld [vmem:[%s3 + $0x7f8] sm:$0xff]
  %v959 = vld [vmem:[%s4] sm:$0x1]
  %v961 = vlaneseq
  %v962 = vshrl.u32 %v961, 7
  %v963 = vsub.s32 0, %v962
  %v964 = vrot.slane %v959, %v963
  %v974 = vcombine.high %v695, %v695
  %v975 = vcombine.high %v696, %v696
  %v976 = vcombine.high %v697, %v697
  %v977 = vcombine.high %v698, %v698
  %v978 = vcombine.high %v699, %v699
  %v979 = vcombine.high %v700, %v700
  %v980 = vcombine.high %v701, %v701
  %v981 = vcombine.high %v702, %v702
  %990 = vmatprep.subr.mxu0 0.0
  %991 = vmatpush1.msra.mxu0 %v718
  %992 = vmatprep.subr.mxu0 0.0
  %993 = vmatpush1.msra.mxu0 %v717
  %994 = vmatprep.subr.mxu0 0.0
  %995 = vmatpush1.msra.mxu0 %v716
  %996 = vmatprep.subr.mxu0 0.0
  %997 = vmatpush1.msra.mxu0 %v715
  %998 = vmatprep.subr.mxu0 0.0
  %999 = vmatpush1.msra.mxu0 %v714
  %1000 = vmatprep.subr.mxu0 0.0
  %1001 = vmatpush1.msra.mxu0 %v713
  %1002 = vmatprep.subr.mxu0 0.0
  %1003 = vmatpush1.msra.mxu0 %v712
  %1004 = vmatprep.subr.mxu0 0.0
  %1005 = vmatpush1.msra.mxu0 %v711
  %1006 = vmatprep.subr.mxu0 0.0
  %1007 = vmatpush1.msra.mxu0 %v710
  %1008 = vmatprep.subr.mxu0 0.0
  %1009 = vmatpush1.msra.mxu0 %v709
  %1010 = vmatprep.subr.mxu0 0.0
  %1011 = vmatpush1.msra.mxu0 %v708
  %1012 = vmatprep.subr.mxu0 0.0
  %1013 = vmatpush1.msra.mxu0 %v707
  %1014 = vmatprep.subr.mxu0 0.0
  %1015 = vmatpush1.msra.mxu0 %v706
  %1016 = vmatprep.subr.mxu0 0.0
  %1017 = vmatpush1.msra.mxu0 %v705
  %1018 = vmatprep.subr.mxu0 0.0
  %1019 = vmatpush1.msra.mxu0 %v704
  %1020 = vmatprep.subr.mxu0 0.0
  %1021 = vmatpush1.msra.mxu0 %v703
  %1022 = vmatprep.subr.mxu0 0.0
  %1023 = vmatpush2.msra.mxu0 %v734
  %1024 = vmatprep.subr.mxu0 0.0
  %1025 = vmatpush2.msra.mxu0 %v733
  %1026 = vmatprep.subr.mxu0 0.0
  %1027 = vmatpush2.msra.mxu0 %v732
  %1028 = vmatprep.subr.mxu0 0.0
  %1029 = vmatpush2.msra.mxu0 %v731
  %1030 = vmatprep.subr.mxu0 0.0
  %1031 = vmatpush2.msra.mxu0 %v730
  %1032 = vmatprep.subr.mxu0 0.0
  %1033 = vmatpush2.msra.mxu0 %v729
  %1034 = vmatprep.subr.mxu0 0.0
  %1035 = vmatpush2.msra.mxu0 %v728
  %1036 = vmatprep.subr.mxu0 0.0
  %1037 = vmatpush2.msra.mxu0 %v727
  %1038 = vmatprep.subr.mxu0 0.0
  %1039 = vmatpush2.msra.mxu0 %v726
  %1040 = vmatprep.subr.mxu0 0.0
  %1041 = vmatpush2.msra.mxu0 %v725
  %1042 = vmatprep.subr.mxu0 0.0
  %1043 = vmatpush2.msra.mxu0 %v724
  %1044 = vmatprep.subr.mxu0 0.0
  %1045 = vmatpush2.msra.mxu0 %v723
  %1046 = vmatprep.subr.mxu0 0.0
  %1047 = vmatpush2.msra.mxu0 %v722
  %1048 = vmatprep.subr.mxu0 0.0
  %1049 = vmatpush2.msra.mxu0 %v721
  %1050 = vmatprep.subr.mxu0 0.0
  %1051 = vmatpush2.msra.mxu0 %v720
  %1052 = vmatprep.subr.mxu0 0.0
  %1053 = vmatpush2.msra.mxu0 %v719
  %1054 = vmatprep.mubr.f32.mxu0 %v974
  %1055 = vmatmul.mubr.f32.gmra.mxu0 %v695
  %v1056 = vpop.f32.mrf.mxu0
  %v1057 = vadd.f32 %v964, %v1056
  %v1058 = vpop.f32.mrf.mxu0
  %1059 = vdwg.mxu0
  %1060 = vmatprep.subr.mxu0 0.0
  %1061 = vmatpush1.msra.mxu0 %v750
  %1062 = vmatprep.subr.mxu0 0.0
  %1063 = vmatpush1.msra.mxu0 %v749
  %1064 = vmatprep.subr.mxu0 0.0
  %1065 = vmatpush1.msra.mxu0 %v748
  %1066 = vmatprep.subr.mxu0 0.0
  %1067 = vmatpush1.msra.mxu0 %v747
  %1068 = vmatprep.subr.mxu0 0.0
  %1069 = vmatpush1.msra.mxu0 %v746
  %1070 = vmatprep.subr.mxu0 0.0
  %1071 = vmatpush1.msra.mxu0 %v745
  %1072 = vmatprep.subr.mxu0 0.0
  %1073 = vmatpush1.msra.mxu0 %v744
  %1074 = vmatprep.subr.mxu0 0.0
  %1075 = vmatpush1.msra.mxu0 %v743
  %1076 = vmatprep.subr.mxu0 0.0
  %1077 = vmatpush1.msra.mxu0 %v742
  %1078 = vmatprep.subr.mxu0 0.0
  %1079 = vmatpush1.msra.mxu0 %v741
  %1080 = vmatprep.subr.mxu0 0.0
  %1081 = vmatpush1.msra.mxu0 %v740
  %1082 = vmatprep.subr.mxu0 0.0
  %1083 = vmatpush1.msra.mxu0 %v739
  %1084 = vmatprep.subr.mxu0 0.0
  %1085 = vmatpush1.msra.mxu0 %v738
  %1086 = vmatprep.subr.mxu0 0.0
  %1087 = vmatpush1.msra.mxu0 %v737
  %1088 = vmatprep.subr.mxu0 0.0
  %1089 = vmatpush1.msra.mxu0 %v736
  %1090 = vmatprep.subr.mxu0 0.0
  %1091 = vmatpush1.msra.mxu0 %v735
  %1092 = vmatprep.subr.mxu0 0.0
  %1093 = vmatpush2.msra.mxu0 %v766
  %1094 = vmatprep.subr.mxu0 0.0
  %1095 = vmatpush2.msra.mxu0 %v765
  %1096 = vmatprep.subr.mxu0 0.0
  %1097 = vmatpush2.msra.mxu0 %v764
  %1098 = vmatprep.subr.mxu0 0.0
  %1099 = vmatpush2.msra.mxu0 %v763
  %1100 = vmatprep.subr.mxu0 0.0
  %1101 = vmatpush2.msra.mxu0 %v762
  %1102 = vmatprep.subr.mxu0 0.0
  %1103 = vmatpush2.msra.mxu0 %v761
  %1104 = vmatprep.subr.mxu0 0.0
  %1105 = vmatpush2.msra.mxu0 %v760
  %1106 = vmatprep.subr.mxu0 0.0
  %1107 = vmatpush2.msra.mxu0 %v759
  %1108 = vmatprep.subr.mxu0 0.0
  %1109 = vmatpush2.msra.mxu0 %v758
  %1110 = vmatprep.subr.mxu0 0.0
  %1111 = vmatpush2.msra.mxu0 %v757
  %1112 = vmatprep.subr.mxu0 0.0
  %1113 = vmatpush2.msra.mxu0 %v756
  %1114 = vmatprep.subr.mxu0 0.0
  %1115 = vmatpush2.msra.mxu0 %v755
  %1116 = vmatprep.subr.mxu0 0.0
  %1117 = vmatpush2.msra.mxu0 %v754
  %1118 = vmatprep.subr.mxu0 0.0
  %1119 = vmatpush2.msra.mxu0 %v753
  %1120 = vmatprep.subr.mxu0 0.0
  %1121 = vmatpush2.msra.mxu0 %v752
  %1122 = vmatprep.subr.mxu0 0.0
  %1123 = vmatpush2.msra.mxu0 %v751
  %1124 = vmatprep.mubr.f32.mxu0 %v975
  %1125 = vmatmul.mubr.f32.gmra.mxu0 %v696
  %v1126 = vpop.f32.mrf.mxu0
  %v1127 = vadd.f32 %v1057, %v1126
  %v1128 = vpop.f32.mrf.mxu0
  %1129 = vdwg.mxu0
  %1130 = vmatprep.subr.mxu0 0.0
  %1131 = vmatpush1.msra.mxu0 %v782
  %1132 = vmatprep.subr.mxu0 0.0
  %1133 = vmatpush1.msra.mxu0 %v781
  %1134 = vmatprep.subr.mxu0 0.0
  %1135 = vmatpush1.msra.mxu0 %v780
  %1136 = vmatprep.subr.mxu0 0.0
  %1137 = vmatpush1.msra.mxu0 %v779
  %1138 = vmatprep.subr.mxu0 0.0
  %1139 = vmatpush1.msra.mxu0 %v778
  %1140 = vmatprep.subr.mxu0 0.0
  %1141 = vmatpush1.msra.mxu0 %v777
  %1142 = vmatprep.subr.mxu0 0.0
  %1143 = vmatpush1.msra.mxu0 %v776
  %1144 = vmatprep.subr.mxu0 0.0
  %1145 = vmatpush1.msra.mxu0 %v775
  %1146 = vmatprep.subr.mxu0 0.0
  %1147 = vmatpush1.msra.mxu0 %v774
  %1148 = vmatprep.subr.mxu0 0.0
  %1149 = vmatpush1.msra.mxu0 %v773
  %1150 = vmatprep.subr.mxu0 0.0
  %1151 = vmatpush1.msra.mxu0 %v772
  %1152 = vmatprep.subr.mxu0 0.0
  %1153 = vmatpush1.msra.mxu0 %v771
  %1154 = vmatprep.subr.mxu0 0.0
  %1155 = vmatpush1.msra.mxu0 %v770
  %1156 = vmatprep.subr.mxu0 0.0
  %1157 = vmatpush1.msra.mxu0 %v769
  %1158 = vmatprep.subr.mxu0 0.0
  %1159 = vmatpush1.msra.mxu0 %v768
  %1160 = vmatprep.subr.mxu0 0.0
  %1161 = vmatpush1.msra.mxu0 %v767
  %1162 = vmatprep.subr.mxu0 0.0
  %1163 = vmatpush2.msra.mxu0 %v798
  %1164 = vmatprep.subr.mxu0 0.0
  %1165 = vmatpush2.msra.mxu0 %v797
  %1166 = vmatprep.subr.mxu0 0.0
  %1167 = vmatpush2.msra.mxu0 %v796
  %1168 = vmatprep.subr.mxu0 0.0
  %1169 = vmatpush2.msra.mxu0 %v795
  %1170 = vmatprep.subr.mxu0 0.0
  %1171 = vmatpush2.msra.mxu0 %v794
  %1172 = vmatprep.subr.mxu0 0.0
  %1173 = vmatpush2.msra.mxu0 %v793
  %1174 = vmatprep.subr.mxu0 0.0
  %1175 = vmatpush2.msra.mxu0 %v792
  %1176 = vmatprep.subr.mxu0 0.0
  %1177 = vmatpush2.msra.mxu0 %v791
  %1178 = vmatprep.subr.mxu0 0.0
  %1179 = vmatpush2.msra.mxu0 %v790
  %1180 = vmatprep.subr.mxu0 0.0
  %1181 = vmatpush2.msra.mxu0 %v789
  %1182 = vmatprep.subr.mxu0 0.0
  %1183 = vmatpush2.msra.mxu0 %v788
  %1184 = vmatprep.subr.mxu0 0.0
  %1185 = vmatpush2.msra.mxu0 %v787
  %1186 = vmatprep.subr.mxu0 0.0
  %1187 = vmatpush2.msra.mxu0 %v786
  %1188 = vmatprep.subr.mxu0 0.0
  %1189 = vmatpush2.msra.mxu0 %v785
  %1190 = vmatprep.subr.mxu0 0.0
  %1191 = vmatpush2.msra.mxu0 %v784
  %1192 = vmatprep.subr.mxu0 0.0
  %1193 = vmatpush2.msra.mxu0 %v783
  %1194 = vmatprep.mubr.f32.mxu0 %v976
  %1195 = vmatmul.mubr.f32.gmra.mxu0 %v697
  %v1196 = vpop.f32.mrf.mxu0
  %v1197 = vadd.f32 %v1127, %v1196
  %v1198 = vpop.f32.mrf.mxu0
  %1199 = vdwg.mxu0
  %1200 = vmatprep.subr.mxu0 0.0
  %1201 = vmatpush1.msra.mxu0 %v814
  %1202 = vmatprep.subr.mxu0 0.0
  %1203 = vmatpush1.msra.mxu0 %v813
  %1204 = vmatprep.subr.mxu0 0.0
  %1205 = vmatpush1.msra.mxu0 %v812
  %1206 = vmatprep.subr.mxu0 0.0
  %1207 = vmatpush1.msra.mxu0 %v811
  %1208 = vmatprep.subr.mxu0 0.0
  %1209 = vmatpush1.msra.mxu0 %v810
  %1210 = vmatprep.subr.mxu0 0.0
  %1211 = vmatpush1.msra.mxu0 %v809
  %1212 = vmatprep.subr.mxu0 0.0
  %1213 = vmatpush1.msra.mxu0 %v808
  %1214 = vmatprep.subr.mxu0 0.0
  %1215 = vmatpush1.msra.mxu0 %v807
  %1216 = vmatprep.subr.mxu0 0.0
  %1217 = vmatpush1.msra.mxu0 %v806
  %1218 = vmatprep.subr.mxu0 0.0
  %1219 = vmatpush1.msra.mxu0 %v805
  %1220 = vmatprep.subr.mxu0 0.0
  %1221 = vmatpush1.msra.mxu0 %v804
  %1222 = vmatprep.subr.mxu0 0.0
  %1223 = vmatpush1.msra.mxu0 %v803
  %1224 = vmatprep.subr.mxu0 0.0
  %1225 = vmatpush1.msra.mxu0 %v802
  %1226 = vmatprep.subr.mxu0 0.0
  %1227 = vmatpush1.msra.mxu0 %v801
  %1228 = vmatprep.subr.mxu0 0.0
  %1229 = vmatpush1.msra.mxu0 %v800
  %1230 = vmatprep.subr.mxu0 0.0
  %1231 = vmatpush1.msra.mxu0 %v799
  %1232 = vmatprep.subr.mxu0 0.0
  %1233 = vmatpush2.msra.mxu0 %v830
  %1234 = vmatprep.subr.mxu0 0.0
  %1235 = vmatpush2.msra.mxu0 %v829
  %1236 = vmatprep.subr.mxu0 0.0
  %1237 = vmatpush2.msra.mxu0 %v828
  %1238 = vmatprep.subr.mxu0 0.0
  %1239 = vmatpush2.msra.mxu0 %v827
  %1240 = vmatprep.subr.mxu0 0.0
  %1241 = vmatpush2.msra.mxu0 %v826
  %1242 = vmatprep.subr.mxu0 0.0
  %1243 = vmatpush2.msra.mxu0 %v825
  %1244 = vmatprep.subr.mxu0 0.0
  %1245 = vmatpush2.msra.mxu0 %v824
  %1246 = vmatprep.subr.mxu0 0.0
  %1247 = vmatpush2.msra.mxu0 %v823
  %1248 = vmatprep.subr.mxu0 0.0
  %1249 = vmatpush2.msra.mxu0 %v822
  %1250 = vmatprep.subr.mxu0 0.0
  %1251 = vmatpush2.msra.mxu0 %v821
  %1252 = vmatprep.subr.mxu0 0.0
  %1253 = vmatpush2.msra.mxu0 %v820
  %1254 = vmatprep.subr.mxu0 0.0
  %1255 = vmatpush2.msra.mxu0 %v819
  %1256 = vmatprep.subr.mxu0 0.0
  %1257 = vmatpush2.msra.mxu0 %v818
  %1258 = vmatprep.subr.mxu0 0.0
  %1259 = vmatpush2.msra.mxu0 %v817
  %1260 = vmatprep.subr.mxu0 0.0
  %1261 = vmatpush2.msra.mxu0 %v816
  %1262 = vmatprep.subr.mxu0 0.0
  %1263 = vmatpush2.msra.mxu0 %v815
  %1264 = vmatprep.mubr.f32.mxu0 %v977
  %1265 = vmatmul.mubr.f32.gmra.mxu0 %v698
  %v1266 = vpop.f32.mrf.mxu0
  %v1267 = vadd.f32 %v1197, %v1266
  %v1268 = vpop.f32.mrf.mxu0
  %1269 = vdwg.mxu0
  %1270 = vmatprep.subr.mxu0 0.0
  %1271 = vmatpush1.msra.mxu0 %v846
  %1272 = vmatprep.subr.mxu0 0.0
  %1273 = vmatpush1.msra.mxu0 %v845
  %1274 = vmatprep.subr.mxu0 0.0
  %1275 = vmatpush1.msra.mxu0 %v844
  %1276 = vmatprep.subr.mxu0 0.0
  %1277 = vmatpush1.msra.mxu0 %v843
  %1278 = vmatprep.subr.mxu0 0.0
  %1279 = vmatpush1.msra.mxu0 %v842
  %1280 = vmatprep.subr.mxu0 0.0
  %1281 = vmatpush1.msra.mxu0 %v841
  %1282 = vmatprep.subr.mxu0 0.0
  %1283 = vmatpush1.msra.mxu0 %v840
  %1284 = vmatprep.subr.mxu0 0.0
  %1285 = vmatpush1.msra.mxu0 %v839
  %1286 = vmatprep.subr.mxu0 0.0
  %1287 = vmatpush1.msra.mxu0 %v838
  %1288 = vmatprep.subr.mxu0 0.0
  %1289 = vmatpush1.msra.mxu0 %v837
  %1290 = vmatprep.subr.mxu0 0.0
  %1291 = vmatpush1.msra.mxu0 %v836
  %1292 = vmatprep.subr.mxu0 0.0
  %1293 = vmatpush1.msra.mxu0 %v835
  %1294 = vmatprep.subr.mxu0 0.0
  %1295 = vmatpush1.msra.mxu0 %v834
  %1296 = vmatprep.subr.mxu0 0.0
  %1297 = vmatpush1.msra.mxu0 %v833
  %1298 = vmatprep.subr.mxu0 0.0
  %1299 = vmatpush1.msra.mxu0 %v832
  %1300 = vmatprep.subr.mxu0 0.0
  %1301 = vmatpush1.msra.mxu0 %v831
  %1302 = vmatprep.subr.mxu0 0.0
  %1303 = vmatpush2.msra.mxu0 %v862
  %1304 = vmatprep.subr.mxu0 0.0
  %1305 = vmatpush2.msra.mxu0 %v861
  %1306 = vmatprep.subr.mxu0 0.0
  %1307 = vmatpush2.msra.mxu0 %v860
  %1308 = vmatprep.subr.mxu0 0.0
  %1309 = vmatpush2.msra.mxu0 %v859
  %1310 = vmatprep.subr.mxu0 0.0
  %1311 = vmatpush2.msra.mxu0 %v858
  %1312 = vmatprep.subr.mxu0 0.0
  %1313 = vmatpush2.msra.mxu0 %v857
  %1314 = vmatprep.subr.mxu0 0.0
  %1315 = vmatpush2.msra.mxu0 %v856
  %1316 = vmatprep.subr.mxu0 0.0
  %1317 = vmatpush2.msra.mxu0 %v855
  %1318 = vmatprep.subr.mxu0 0.0
  %1319 = vmatpush2.msra.mxu0 %v854
  %1320 = vmatprep.subr.mxu0 0.0
  %1321 = vmatpush2.msra.mxu0 %v853
  %1322 = vmatprep.subr.mxu0 0.0
  %1323 = vmatpush2.msra.mxu0 %v852
  %1324 = vmatprep.subr.mxu0 0.0
  %1325 = vmatpush2.msra.mxu0 %v851
  %1326 = vmatprep.subr.mxu0 0.0
  %1327 = vmatpush2.msra.mxu0 %v850
  %1328 = vmatprep.subr.mxu0 0.0
  %1329 = vmatpush2.msra.mxu0 %v849
  %1330 = vmatprep.subr.mxu0 0.0
  %1331 = vmatpush2.msra.mxu0 %v848
  %1332 = vmatprep.subr.mxu0 0.0
  %1333 = vmatpush2.msra.mxu0 %v847
  %1334 = vmatprep.mubr.f32.mxu0 %v978
  %1335 = vmatmul.mubr.f32.gmra.mxu0 %v699
  %v1336 = vpop.f32.mrf.mxu0
  %v1337 = vadd.f32 %v1267, %v1336
  %v1338 = vpop.f32.mrf.mxu0
  %1339 = vdwg.mxu0
  %1340 = vmatprep.subr.mxu0 0.0
  %1341 = vmatpush1.msra.mxu0 %v878
  %1342 = vmatprep.subr.mxu0 0.0
  %1343 = vmatpush1.msra.mxu0 %v877
  %1344 = vmatprep.subr.mxu0 0.0
  %1345 = vmatpush1.msra.mxu0 %v876
  %1346 = vmatprep.subr.mxu0 0.0
  %1347 = vmatpush1.msra.mxu0 %v875
  %1348 = vmatprep.subr.mxu0 0.0
  %1349 = vmatpush1.msra.mxu0 %v874
  %1350 = vmatprep.subr.mxu0 0.0
  %1351 = vmatpush1.msra.mxu0 %v873
  %1352 = vmatprep.subr.mxu0 0.0
  %1353 = vmatpush1.msra.mxu0 %v872
  %1354 = vmatprep.subr.mxu0 0.0
  %1355 = vmatpush1.msra.mxu0 %v871
  %1356 = vmatprep.subr.mxu0 0.0
  %1357 = vmatpush1.msra.mxu0 %v870
  %1358 = vmatprep.subr.mxu0 0.0
  %1359 = vmatpush1.msra.mxu0 %v869
  %1360 = vmatprep.subr.mxu0 0.0
  %1361 = vmatpush1.msra.mxu0 %v868
  %1362 = vmatprep.subr.mxu0 0.0
  %1363 = vmatpush1.msra.mxu0 %v867
  %1364 = vmatprep.subr.mxu0 0.0
  %1365 = vmatpush1.msra.mxu0 %v866
  %1366 = vmatprep.subr.mxu0 0.0
  %1367 = vmatpush1.msra.mxu0 %v865
  %1368 = vmatprep.subr.mxu0 0.0
  %1369 = vmatpush1.msra.mxu0 %v864
  %1370 = vmatprep.subr.mxu0 0.0
  %1371 = vmatpush1.msra.mxu0 %v863
  %1372 = vmatprep.subr.mxu0 0.0
  %1373 = vmatpush2.msra.mxu0 %v894
  %1374 = vmatprep.subr.mxu0 0.0
  %1375 = vmatpush2.msra.mxu0 %v893
  %1376 = vmatprep.subr.mxu0 0.0
  %1377 = vmatpush2.msra.mxu0 %v892
  %1378 = vmatprep.subr.mxu0 0.0
  %1379 = vmatpush2.msra.mxu0 %v891
  %1380 = vmatprep.subr.mxu0 0.0
  %1381 = vmatpush2.msra.mxu0 %v890
  %1382 = vmatprep.subr.mxu0 0.0
  %1383 = vmatpush2.msra.mxu0 %v889
  %1384 = vmatprep.subr.mxu0 0.0
  %1385 = vmatpush2.msra.mxu0 %v888
  %1386 = vmatprep.subr.mxu0 0.0
  %1387 = vmatpush2.msra.mxu0 %v887
  %1388 = vmatprep.subr.mxu0 0.0
  %1389 = vmatpush2.msra.mxu0 %v886
  %1390 = vmatprep.subr.mxu0 0.0
  %1391 = vmatpush2.msra.mxu0 %v885
  %1392 = vmatprep.subr.mxu0 0.0
  %1393 = vmatpush2.msra.mxu0 %v884
  %1394 = vmatprep.subr.mxu0 0.0
  %1395 = vmatpush2.msra.mxu0 %v883
  %1396 = vmatprep.subr.mxu0 0.0
  %1397 = vmatpush2.msra.mxu0 %v882
  %1398 = vmatprep.subr.mxu0 0.0
  %1399 = vmatpush2.msra.mxu0 %v881
  %1400 = vmatprep.subr.mxu0 0.0
  %1401 = vmatpush2.msra.mxu0 %v880
  %1402 = vmatprep.subr.mxu0 0.0
  %1403 = vmatpush2.msra.mxu0 %v879
  %1404 = vmatprep.mubr.f32.mxu0 %v979
  %1405 = vmatmul.mubr.f32.gmra.mxu0 %v700
  %v1406 = vpop.f32.mrf.mxu0
  %v1407 = vadd.f32 %v1337, %v1406
  %v1408 = vpop.f32.mrf.mxu0
  %1409 = vdwg.mxu0
  %1410 = vmatprep.subr.mxu0 0.0
  %1411 = vmatpush1.msra.mxu0 %v910
  %1412 = vmatprep.subr.mxu0 0.0
  %1413 = vmatpush1.msra.mxu0 %v909
  %1414 = vmatprep.subr.mxu0 0.0
  %1415 = vmatpush1.msra.mxu0 %v908
  %1416 = vmatprep.subr.mxu0 0.0
  %1417 = vmatpush1.msra.mxu0 %v907
  %1418 = vmatprep.subr.mxu0 0.0
  %1419 = vmatpush1.msra.mxu0 %v906
  %1420 = vmatprep.subr.mxu0 0.0
  %1421 = vmatpush1.msra.mxu0 %v905
  %1422 = vmatprep.subr.mxu0 0.0
  %1423 = vmatpush1.msra.mxu0 %v904
  %1424 = vmatprep.subr.mxu0 0.0
  %1425 = vmatpush1.msra.mxu0 %v903
  %1426 = vmatprep.subr.mxu0 0.0
  %1427 = vmatpush1.msra.mxu0 %v902
  %1428 = vmatprep.subr.mxu0 0.0
  %1429 = vmatpush1.msra.mxu0 %v901
  %1430 = vmatprep.subr.mxu0 0.0
  %1431 = vmatpush1.msra.mxu0 %v900
  %1432 = vmatprep.subr.mxu0 0.0
  %1433 = vmatpush1.msra.mxu0 %v899
  %1434 = vmatprep.subr.mxu0 0.0
  %1435 = vmatpush1.msra.mxu0 %v898
  %1436 = vmatprep.subr.mxu0 0.0
  %1437 = vmatpush1.msra.mxu0 %v897
  %1438 = vmatprep.subr.mxu0 0.0
  %1439 = vmatpush1.msra.mxu0 %v896
  %1440 = vmatprep.subr.mxu0 0.0
  %1441 = vmatpush1.msra.mxu0 %v895
  %1442 = vmatprep.subr.mxu0 0.0
  %1443 = vmatpush2.msra.mxu0 %v926
  %1444 = vmatprep.subr.mxu0 0.0
  %1445 = vmatpush2.msra.mxu0 %v925
  %1446 = vmatprep.subr.mxu0 0.0
  %1447 = vmatpush2.msra.mxu0 %v924
  %1448 = vmatprep.subr.mxu0 0.0
  %1449 = vmatpush2.msra.mxu0 %v923
  %1450 = vmatprep.subr.mxu0 0.0
  %1451 = vmatpush2.msra.mxu0 %v922
  %1452 = vmatprep.subr.mxu0 0.0
  %1453 = vmatpush2.msra.mxu0 %v921
  %1454 = vmatprep.subr.mxu0 0.0
  %1455 = vmatpush2.msra.mxu0 %v920
  %1456 = vmatprep.subr.mxu0 0.0
  %1457 = vmatpush2.msra.mxu0 %v919
  %1458 = vmatprep.subr.mxu0 0.0
  %1459 = vmatpush2.msra.mxu0 %v918
  %1460 = vmatprep.subr.mxu0 0.0
  %1461 = vmatpush2.msra.mxu0 %v917
  %1462 = vmatprep.subr.mxu0 0.0
  %1463 = vmatpush2.msra.mxu0 %v916
  %1464 = vmatprep.subr.mxu0 0.0
  %1465 = vmatpush2.msra.mxu0 %v915
  %1466 = vmatprep.subr.mxu0 0.0
  %1467 = vmatpush2.msra.mxu0 %v914
  %1468 = vmatprep.subr.mxu0 0.0
  %1469 = vmatpush2.msra.mxu0 %v913
  %1470 = vmatprep.subr.mxu0 0.0
  %1471 = vmatpush2.msra.mxu0 %v912
  %1472 = vmatprep.subr.mxu0 0.0
  %1473 = vmatpush2.msra.mxu0 %v911
  %1474 = vmatprep.mubr.f32.mxu0 %v980
  %1475 = vmatmul.mubr.f32.gmra.mxu0 %v701
  %v1476 = vpop.f32.mrf.mxu0
  %v1477 = vadd.f32 %v1407, %v1476
  %v1478 = vpop.f32.mrf.mxu0
  %1479 = vdwg.mxu0
  %1480 = vmatprep.subr.mxu0 0.0
  %1481 = vmatpush1.msra.mxu0 %v942
  %1482 = vmatprep.subr.mxu0 0.0
  %1483 = vmatpush1.msra.mxu0 %v941
  %1484 = vmatprep.subr.mxu0 0.0
  %1485 = vmatpush1.msra.mxu0 %v940
  %1486 = vmatprep.subr.mxu0 0.0
  %1487 = vmatpush1.msra.mxu0 %v939
  %1488 = vmatprep.subr.mxu0 0.0
  %1489 = vmatpush1.msra.mxu0 %v938
  %1490 = vmatprep.subr.mxu0 0.0
  %1491 = vmatpush1.msra.mxu0 %v937
  %1492 = vmatprep.subr.mxu0 0.0
  %1493 = vmatpush1.msra.mxu0 %v936
  %1494 = vmatprep.subr.mxu0 0.0
  %1495 = vmatpush1.msra.mxu0 %v935
  %1496 = vmatprep.subr.mxu0 0.0
  %1497 = vmatpush1.msra.mxu0 %v934
  %1498 = vmatprep.subr.mxu0 0.0
  %1499 = vmatpush1.msra.mxu0 %v933
  %1500 = vmatprep.subr.mxu0 0.0
  %1501 = vmatpush1.msra.mxu0 %v932
  %1502 = vmatprep.subr.mxu0 0.0
  %1503 = vmatpush1.msra.mxu0 %v931
  %1504 = vmatprep.subr.mxu0 0.0
  %1505 = vmatpush1.msra.mxu0 %v930
  %1506 = vmatprep.subr.mxu0 0.0
  %1507 = vmatpush1.msra.mxu0 %v929
  %1508 = vmatprep.subr.mxu0 0.0
  %1509 = vmatpush1.msra.mxu0 %v928
  %1510 = vmatprep.subr.mxu0 0.0
  %1511 = vmatpush1.msra.mxu0 %v927
  %1512 = vmatprep.subr.mxu0 0.0
  %1513 = vmatpush2.msra.mxu0 %v958
  %1514 = vmatprep.subr.mxu0 0.0
  %1515 = vmatpush2.msra.mxu0 %v957
  %1516 = vmatprep.subr.mxu0 0.0
  %1517 = vmatpush2.msra.mxu0 %v956
  %1518 = vmatprep.subr.mxu0 0.0
  %1519 = vmatpush2.msra.mxu0 %v955
  %1520 = vmatprep.subr.mxu0 0.0
  %1521 = vmatpush2.msra.mxu0 %v954
  %1522 = vmatprep.subr.mxu0 0.0
  %1523 = vmatpush2.msra.mxu0 %v953
  %1524 = vmatprep.subr.mxu0 0.0
  %1525 = vmatpush2.msra.mxu0 %v952
  %1526 = vmatprep.subr.mxu0 0.0
  %1527 = vmatpush2.msra.mxu0 %v951
  %1528 = vmatprep.subr.mxu0 0.0
  %1529 = vmatpush2.msra.mxu0 %v950
  %1530 = vmatprep.subr.mxu0 0.0
  %1531 = vmatpush2.msra.mxu0 %v949
  %1532 = vmatprep.subr.mxu0 0.0
  %1533 = vmatpush2.msra.mxu0 %v948
  %1534 = vmatprep.subr.mxu0 0.0
  %1535 = vmatpush2.msra.mxu0 %v947
  %1536 = vmatprep.subr.mxu0 0.0
  %1537 = vmatpush2.msra.mxu0 %v946
  %1538 = vmatprep.subr.mxu0 0.0
  %1539 = vmatpush2.msra.mxu0 %v945
  %1540 = vmatprep.subr.mxu0 0.0
  %1541 = vmatpush2.msra.mxu0 %v944
  %1542 = vmatprep.subr.mxu0 0.0
  %1543 = vmatpush2.msra.mxu0 %v943
  %1544 = vmatprep.mubr.f32.mxu0 %v981
  %1545 = vmatmul.mubr.f32.gmra.mxu0 %v702
  %v1546 = vpop.f32.mrf.mxu0
  %v1547 = vadd.f32 %v1477, %v1546
  %v1548 = vpop.f32.mrf.mxu0
  %1549 = vdwg.mxu0
  %vm1550 = vcmask 257024
  %1551 = vst.msk [vmem:[%s5] sm:$0xf] %vm1550, %v1547
  // Predicated region
  $region22: #{snn_forward.1} parent=0 // pred_check
    _
  $region23: #{snn_forward.1} parent=0 // pred_check_branch
    %1553 = sbr.rel (0) target = $region25
  $region24: #{snn_forward.1} parent=0 // pred_region
    _
  $region25: #{snn_forward.1} parent=0 // pred_fallthru
    _
  // Predicated region
  $region26: #{snn_forward.1} parent=0 // pred_check
    _
  $region27: #{snn_forward.1} parent=0 // pred_check_branch
    %1555 = sbr.rel (0) target = $region29
  $region28: #{snn_forward.1} parent=0 // pred_region
    _
  $region29: #{snn_forward.1} parent=0 // pred_fallthru
    _

</llo_original>
